<compile_context>
chip_gen: v7x
topology: tpu7x:2x2x1
jax: 0.10.0
libtpu: 0.0.40
codegen_flags: <defaults>
</compile_context>

<pallas_src>
import functools
import math

import jax
import jax.numpy as jnp
from jax.experimental import pallas as pl
from jax.experimental.pallas import tpu as pltpu


# ---------------------------------------------------------------------------
# helpers
# ---------------------------------------------------------------------------

def _round_up(x, m):
    return ((x + m - 1) // m) * m


def _pad2(a, rows, cols):
    r, c = a.shape
    if r == rows and c == cols:
        return a
    return jnp.pad(a, ((0, rows - r), (0, cols - c)))


def _to_bf16(a):
    return a if a.dtype == jnp.bfloat16 else a.astype(jnp.bfloat16)


def _pick_tile(dim, cap, mult):
    """Largest multiple of `mult` that divides round_up(dim, mult) and is <= cap."""
    d_up = _round_up(dim, mult)
    best = mult
    t = mult
    while t <= min(cap, d_up):
        if d_up % t == 0:
            best = t
        t += mult
    return min(best, d_up)


def _pick_head_group(n_heads, head_dim, seq_len, score_budget_bytes=8 << 20):
    """Largest head-group G with G*head_dim lane-aligned (%128) and bounded f32 score VMEM."""
    candidates = [g for g in range(n_heads, 0, -1)
                  if n_heads % g == 0 and (g * head_dim) % 128 == 0]
    if not candidates:
        return None
    for g in candidates:                       # descending
        if 2 * g * seq_len * seq_len * 4 <= score_budget_bytes:
            return g
    return candidates[-1]                      # smallest lane-aligned group


# ---------------------------------------------------------------------------
# Fused Linear: tiled matmul + bias + optional GELU + optional (residual + LayerNorm)
# bf16 MXU inputs, f32 VMEM accumulator.
# ---------------------------------------------------------------------------

def _linear_kernel(*refs, act, fuse_ln, eps):
    if fuse_ln:
        x_ref, w_ref, b_ref, r_ref, g_ref, beta_ref, o_ref, acc_ref = refs
    else:
        x_ref, w_ref, b_ref, o_ref, acc_ref = refs
    k = pl.program_id(2)

    @pl.when(k == 0)
    def _():
        acc_ref[...] = jnp.zeros_like(acc_ref)

    acc_ref[...] += jnp.dot(x_ref[...], w_ref[...],
                            preferred_element_type=jnp.float32)

    @pl.when(k == pl.num_programs(2) - 1)
    def _():
        y = acc_ref[...] + b_ref[...]
        if act == "gelu":                    # exact (erf) GELU, as BERT uses
            y = 0.5 * y * (1.0 + jax.lax.erf(y * (1.0 / math.sqrt(2.0))))
        elif act == "tanh":
            y = jnp.tanh(y)
        if fuse_ln:                          # residual add + LayerNorm over full rows
            y = y + r_ref[...].astype(jnp.float32)
            mu = jnp.mean(y, axis=-1, keepdims=True)
            yc = y - mu
            var = jnp.mean(yc * yc, axis=-1, keepdims=True)
            y = yc * jax.lax.rsqrt(var + eps) * g_ref[...] + beta_ref[...]
        o_ref[...] = y.astype(o_ref.dtype)


def pallas_linear(x, w, b, act="none", residual=None, ln_gamma=None, ln_beta=None,
                  eps=1e-12, out_dtype=jnp.bfloat16, tm=256, tn=512, tk=1024):
    M, K = x.shape
    Kw, N = w.shape
    assert K == Kw
    fuse_ln = ln_gamma is not None
    if fuse_ln:
        assert ln_beta is not None and residual is not None
        assert N % 128 == 0, "fused LayerNorm epilogue needs a lane-aligned output width"
        tn = N                      # full feature rows per tile so LN sees the whole row
    else:
        tn = _pick_tile(N, tn, 128)
    tk = _pick_tile(K, tk, 128)     # divides the (128-rounded) real K -> no wasted MXU work
    tm = min(tm, _round_up(M, 16))
    Mp, Kp, Np = _round_up(M, tm), _round_up(K, tk), _round_up(N, tn)

    xp = _pad2(_to_bf16(x), Mp, Kp)
    wp = _pad2(_to_bf16(w), Kp, Np)
    bp = _pad2(b.reshape(1, N).astype(jnp.float32), 1, Np)

    args = [xp, wp, bp]
    in_specs = [
        pl.BlockSpec((tm, tk), lambda i, j, k: (i, k)),
        pl.BlockSpec((tk, tn), lambda i, j, k: (k, j)),
        pl.BlockSpec((1, tn), lambda i, j, k: (0, j)),
    ]
    if fuse_ln:
        args += [_pad2(_to_bf16(residual), Mp, N),
                 ln_gamma.reshape(1, N).astype(jnp.float32),
                 ln_beta.reshape(1, N).astype(jnp.float32)]
        in_specs += [
            pl.BlockSpec((tm, N), lambda i, j, k: (i, 0)),
            pl.BlockSpec((1, N), lambda i, j, k: (0, 0)),
            pl.BlockSpec((1, N), lambda i, j, k: (0, 0)),
        ]

    kernel = functools.partial(_linear_kernel, act=act, fuse_ln=fuse_ln, eps=eps)
    out = pl.pallas_call(
        kernel,
        out_shape=jax.ShapeDtypeStruct((Mp, Np), out_dtype),
        grid=(Mp // tm, Np // tn, Kp // tk),
        in_specs=in_specs,
        out_specs=pl.BlockSpec((tm, tn), lambda i, j, k: (i, j)),
        scratch_shapes=[pltpu.VMEM((tm, tn), jnp.float32)],
        compiler_params=pltpu.CompilerParams(
            dimension_semantics=("parallel", "parallel", "arbitrary")),
    )(*args)
    if Mp != M or Np != N:
        out = out[:M, :N]
    return out


# ---------------------------------------------------------------------------
# LayerNorm (embeddings only; encoder LNs are fused into the preceding linear)
# ---------------------------------------------------------------------------

def _layernorm_kernel(x_ref, g_ref, b_ref, o_ref, *, eps):
    x = x_ref[...].astype(jnp.float32)
    mu = jnp.mean(x, axis=-1, keepdims=True)
    xc = x - mu
    var = jnp.mean(xc * xc, axis=-1, keepdims=True)
    o_ref[...] = (xc * jax.lax.rsqrt(var + eps) * g_ref[...] + b_ref[...]).astype(o_ref.dtype)


def pallas_layernorm(x, gamma, beta, eps=1e-12, out_dtype=jnp.bfloat16, tm=512):
    M, H = x.shape
    tm = min(tm, _round_up(M, 16))
    Mp = _round_up(M, tm)
    xp = _pad2(x, Mp, H)
    kernel = functools.partial(_layernorm_kernel, eps=eps)
    out = pl.pallas_call(
        kernel,
        out_shape=jax.ShapeDtypeStruct((Mp, H), out_dtype),
        grid=(Mp // tm,),
        in_specs=[pl.BlockSpec((tm, H), lambda i: (i, 0)),
                  pl.BlockSpec((1, H), lambda i: (0, 0)),
                  pl.BlockSpec((1, H), lambda i: (0, 0))],
        out_specs=pl.BlockSpec((tm, H), lambda i: (i, 0)),
        compiler_params=pltpu.CompilerParams(dimension_semantics=("parallel",)),
    )(xp, gamma.reshape(1, H).astype(jnp.float32), beta.reshape(1, H).astype(jnp.float32))
    return out[:M] if Mp != M else out


# ---------------------------------------------------------------------------
# Attention: Q/K/V blocks sliced straight out of the fused (B, S, 3H) QKV activation,
# G heads per grid step, lane-dense (G*Dh % 128 == 0) input and output blocks.
# ---------------------------------------------------------------------------

def _attention_kernel(q_ref, k_ref, v_ref, m_ref, o_ref, *, scale, n_group, head_dim):
    q = q_ref[0] * scale            # (S, G*Dh) bf16 — scale q, not the (S,S) f32 scores
    k = k_ref[0]
    v = v_ref[0]
    mask = m_ref[0]                 # (1, S) f32 additive mask
    outs = []
    for g in range(n_group):        # static unroll over heads in this group
        lo = g * head_dim
        qg = q[:, lo:lo + head_dim]
        kg = k[:, lo:lo + head_dim]
        vg = v[:, lo:lo + head_dim]
        s = jnp.einsum("qd,kd->qk", qg, kg,
                       preferred_element_type=jnp.float32)      # (S, S)
        s = s + mask
        s = s - jnp.max(s, axis=-1, keepdims=True)
        p = jnp.exp(s)
        p = p * pl.reciprocal(jnp.sum(p, axis=-1, keepdims=True), approx=True)
        outs.append(jnp.dot(p.astype(vg.dtype), vg,
                            preferred_element_type=jnp.float32))  # (S, Dh)
    o = outs[0] if len(outs) == 1 else jnp.concatenate(outs, axis=-1)
    o_ref[0] = o.astype(o_ref.dtype)        # dense (S, G*Dh) store


def pallas_attention(qkv3, add_mask, scale, n_heads, head_dim, group):
    # qkv3: (B, S, 3H) bf16 with column order [Q | K | V]; add_mask: (B, 1, S) f32
    B, S, threeH = qkv3.shape
    H = threeH // 3
    GD = group * head_dim
    n_groups = n_heads // group
    kernel = functools.partial(_attention_kernel, scale=scale,
                               n_group=group, head_dim=head_dim)
    return pl.pallas_call(
        kernel,
        out_shape=jax.ShapeDtypeStruct((B, S, H), jnp.bfloat16),
        grid=(B, n_groups),
        in_specs=[
            pl.BlockSpec((1, S, GD), lambda b, h: (b, 0, h)),                 # Q group
            pl.BlockSpec((1, S, GD), lambda b, h: (b, 0, h + n_groups)),      # K group
            pl.BlockSpec((1, S, GD), lambda b, h: (b, 0, h + 2 * n_groups)),  # V group
            pl.BlockSpec((1, 1, S), lambda b, h: (b, 0, 0)),                  # mask
        ],
        out_specs=pl.BlockSpec((1, S, GD), lambda b, h: (b, 0, h)),
        compiler_params=pltpu.CompilerParams(
            dimension_semantics=("parallel", "parallel")),
    )(qkv3, qkv3, qkv3, add_mask)


def _jax_attention_fallback(qkv3, add_mask, scale, n_heads, head_dim):
    # TODO(synk): head_dim with no 128-lane-aligned head grouping — plain-JAX attention fallback.
    B, S, threeH = qkv3.shape
    H = threeH // 3
    q, k, v = jnp.split(qkv3.astype(jnp.float32), 3, axis=-1)

    def sh(t):
        return t.reshape(B, S, n_heads, head_dim).transpose(0, 2, 1, 3)

    s = jnp.einsum("bhqd,bhkd->bhqk", sh(q) * scale, sh(k)) + add_mask[:, :, None, :]
    p = jax.nn.softmax(s, axis=-1)
    o = jnp.einsum("bhqk,bhkd->bhqd", p, sh(v))
    return o.transpose(0, 2, 1, 3).reshape(B, S, H).astype(jnp.bfloat16)


# ---------------------------------------------------------------------------
# Deterministic parameter init (BERT-style: N(0, 0.02), LN gamma=1 beta=0).
# Matmul weights stored bf16 once (x @ w layout, QKV fused as [Wq | Wk | Wv]).
# ---------------------------------------------------------------------------

def init_params(key, *, vocab, max_pos, type_vocab, H, n_layers, n_heads, inter):
    def nrm(k, shape, dtype=jnp.float32):
        return (jax.random.normal(k, shape, jnp.float32) * 0.02).astype(dtype)

    keys = iter(jax.random.split(key, 8 + n_layers * 8))
    bf = jnp.bfloat16
    p = {
        "word_emb": nrm(next(keys), (vocab, H)),
        "pos_emb": nrm(next(keys), (max_pos, H)),
        "type_emb": nrm(next(keys), (type_vocab, H)),
        "emb_ln_g": jnp.ones((H,), jnp.float32),
        "emb_ln_b": jnp.zeros((H,), jnp.float32),
        # pooler: Linear(H, H) + tanh
        "pool_w": nrm(next(keys), (H, H)),
        "pool_b": jnp.zeros((H,), jnp.float32),
        # classifier: Linear(H, 2)
        "cls_w": nrm(next(keys), (H, 2)),
        "cls_b": jnp.zeros((2,), jnp.float32),
        "layers": [],
    }
    for _ in range(n_layers):
        lp = {
            "w_qkv": nrm(next(keys), (H, 3 * H), bf),
            "b_qkv": jnp.zeros((3 * H,), jnp.float32),
            "wo": nrm(next(keys), (H, H), bf), "bo": jnp.zeros((H,), jnp.float32),
            "ln1_g": jnp.ones((H,), jnp.float32), "ln1_b": jnp.zeros((H,), jnp.float32),
            "w1": nrm(next(keys), (H, inter), bf), "b1": jnp.zeros((inter,), jnp.float32),
            "w2": nrm(next(keys), (inter, H), bf), "b2": jnp.zeros((H,), jnp.float32),
            "ln2_g": jnp.ones((H,), jnp.float32), "ln2_b": jnp.zeros((H,), jnp.float32),
        }
        p["layers"].append(lp)
    return p


# ---------------------------------------------------------------------------
# Forward pass (== KB_WiCModel.forward in eval mode)
# ---------------------------------------------------------------------------

def kb_wic_forward(params, input_ids, token_type_ids, attention_mask, *,
                   n_heads, output_hidden_states=True):
    B, S = input_ids.shape
    H = params["word_emb"].shape[1]
    Dh = H // n_heads
    scale = 1.0 / math.sqrt(Dh)
    group = _pick_head_group(n_heads, Dh, S)

    # --- embeddings (gathers are glue; LN in Pallas on a bf16 input) ---
    word = params["word_emb"][input_ids]                       # (B, S, H)
    pos = params["pos_emb"][jnp.arange(S)][None, :, :]         # (1, S, H)
    typ = params["type_emb"][token_type_ids]                   # (B, S, H)
    emb_sum = (word + pos + typ).reshape(B * S, H).astype(jnp.bfloat16)
    x = pallas_layernorm(emb_sum, params["emb_ln_g"], params["emb_ln_b"])
    # dropout(hidden_dropout_prob) -> identity in eval mode

    # additive attention mask, kept as (B, 1, S) — not duplicated per head
    add_mask = ((1.0 - attention_mask.astype(jnp.float32)) * -10000.0)[:, None, :]

    hidden_states = [x.reshape(B, S, H)] if output_hidden_states else None

    for lp in params["layers"]:
        qkv = pallas_linear(x, lp["w_qkv"], lp["b_qkv"])       # fused QKV: (B*S, 3H)
        qkv3 = qkv.reshape(B, S, 3 * H)
        if group is not None:
            ctx = pallas_attention(qkv3, add_mask, scale, n_heads, Dh, group)
        else:
            ctx = _jax_attention_fallback(qkv3, add_mask, scale, n_heads, Dh)
        ctx = ctx.reshape(B * S, H)
        # attention output projection with fused residual-add + LayerNorm epilogue
        x = pallas_linear(ctx, lp["wo"], lp["bo"], residual=x,
                          ln_gamma=lp["ln1_g"], ln_beta=lp["ln1_b"])
        ffn = pallas_linear(x, lp["w1"], lp["b1"], act="gelu")
        # FFN output projection with fused residual-add + LayerNorm epilogue
        x = pallas_linear(ffn, lp["w2"], lp["b2"], residual=x,
                          ln_gamma=lp["ln2_g"], ln_beta=lp["ln2_b"])
        if output_hidden_states:
            hidden_states.append(x.reshape(B, S, H))

    last_hidden = x.reshape(B, S, H)

    # --- pooler (tanh(Linear(CLS))) + dropout(eval identity) + classifier Linear(H, 2) ---
    # Lane-sparse / tiny (B rows, N=2): left to plain JAX/XLA.
    cls_tok = last_hidden[:, 0, :].astype(jnp.float32)
    pooled = jnp.tanh(cls_tok @ params["pool_w"] + params["pool_b"])
    logits = pooled @ params["cls_w"] + params["cls_b"]

    outputs = {"last_hidden_state": last_hidden, "pooler_output": pooled}
    if output_hidden_states:
        outputs["hidden_states"] = tuple(hidden_states)
    return outputs, logits


# ---------------------------------------------------------------------------
# Demo
# ---------------------------------------------------------------------------

if __name__ == "__main__":
    # Small but lane-aligned shapes: H=128, 2 heads (Dh=64, head group G=2 -> 128 lanes).
    B, S, H, N_HEADS, N_LAYERS, INTER = 2, 8, 128, 2, 2, 512
    VOCAB, MAX_POS, TYPE_VOCAB = 100, 16, 2

    key = jax.random.PRNGKey(0)
    k_param, k_ids = jax.random.split(key)

    params = init_params(k_param, vocab=VOCAB, max_pos=MAX_POS, type_vocab=TYPE_VOCAB,
                         H=H, n_layers=N_LAYERS, n_heads=N_HEADS, inter=INTER)

    input_ids = jax.random.randint(k_ids, (B, S), 0, VOCAB, dtype=jnp.int32)
    token_type_ids = jnp.concatenate(
        [jnp.zeros((B, S // 2), jnp.int32), jnp.ones((B, S - S // 2), jnp.int32)], axis=1)
    attention_mask = jnp.ones((B, S), jnp.int32)

    forward = jax.jit(functools.partial(kb_wic_forward, n_heads=N_HEADS,
                                        output_hidden_states=True))
    outputs, logits = forward(params, input_ids, token_type_ids, attention_mask)
    jax.block_until_ready(logits)
    jax.block_until_ready(outputs["pooler_output"])

    assert logits.shape == (B, 2)
    assert outputs["last_hidden_state"].shape == (B, S, H)
    assert len(outputs["hidden_states"]) == N_LAYERS + 1
    assert bool(jnp.all(jnp.isfinite(logits)))
    print("KERNEL_OK")
</pallas_src>

<mosaic_0001>
module attributes {stable_mosaic.version = 11 : i64} {
  func.func @_linear_kernel(%arg0: i32, %arg1: i32, %arg2: i32, %arg3: memref<16x128xbf16, #tpu.memory_space<vmem>>, %arg4: memref<128x384xbf16, #tpu.memory_space<vmem>>, %arg5: memref<1x384xf32, #tpu.memory_space<vmem>>, %arg6: memref<16x384xbf16, #tpu.memory_space<vmem>>, %arg7: memref<16x384xf32, #tpu.memory_space<vmem>>) attributes {dimension_semantics = [#tpu.dimension_semantics<parallel>, #tpu.dimension_semantics<parallel>, #tpu.dimension_semantics<arbitrary>], iteration_bounds = array<i64: 1, 1, 1>, scalar_prefetch = 0 : i64, scratch_operands = 1 : i64, tpu.core_type = #tpu.core_type<tc>, window_params = [{transform_indices = @transform_0, window_bounds = array<i64: 16, 128>}, {transform_indices = @transform_1, window_bounds = array<i64: 128, 384>}, {transform_indices = @transform_2, window_bounds = array<i64: 1, 384>}, {transform_indices = @transform_3, window_bounds = array<i64: 16, 384>}]} {
    %c0_i32 = arith.constant 0 : i32
    %0 = arith.cmpi eq, %arg2, %c0_i32 : i32
    %1 = arith.extui %0 : i1 to i32
    %c0_i32_0 = arith.constant 0 : i32
    %2 = arith.cmpi ne, %1, %c0_i32_0 : i32
    scf.if %2 {
      %cst_10 = arith.constant 0.000000e+00 : f32
      %12 = vector.broadcast %cst_10 : f32 to vector<16x384xf32>
      %c0_11 = arith.constant 0 : index
      %c0_12 = arith.constant 0 : index
      %13 = vector.load %arg7[%c0_11, %c0_12] : memref<16x384xf32, #tpu.memory_space<vmem>>, vector<16x384xf32>
      tpu.vector_store %arg7[%c0_11, %c0_12], %12 {strides = array<i32>} : memref<16x384xf32, #tpu.memory_space<vmem>>, vector<16x384xf32>,
    } else {
    }
    %c0 = arith.constant 0 : index
    %c0_1 = arith.constant 0 : index
    %3 = vector.load %arg7[%c0, %c0_1] : memref<16x384xf32, #tpu.memory_space<vmem>>, vector<16x384xf32>
    %c0_2 = arith.constant 0 : index
    %c0_3 = arith.constant 0 : index
    %4 = vector.load %arg3[%c0_2, %c0_3] : memref<16x128xbf16, #tpu.memory_space<vmem>>, vector<16x128xbf16>
    %c0_4 = arith.constant 0 : index
    %c0_5 = arith.constant 0 : index
    %5 = vector.load %arg4[%c0_4, %c0_5] : memref<128x384xbf16, #tpu.memory_space<vmem>>, vector<128x384xbf16>
    %cst = arith.constant dense<0.000000e+00> : vector<16x384xf32>
    %6 = tpu.matmul %4, %5, %cst {dimension_numbers = #tpu.dot_dimension_numbers<[1], [0], [0], [1], [0, 0, 1, 1], [], []>} : vector<16x128xbf16>, vector<128x384xbf16>, vector<16x384xf32> -> vector<16x384xf32>
    %7 = arith.addf %3, %6 : vector<16x384xf32>
    %c0_6 = arith.constant 0 : index
    %c0_7 = arith.constant 0 : index
    %8 = vector.load %arg7[%c0_6, %c0_7] : memref<16x384xf32, #tpu.memory_space<vmem>>, vector<16x384xf32>
    tpu.vector_store %arg7[%c0_6, %c0_7], %7 {strides = array<i32>} : memref<16x384xf32, #tpu.memory_space<vmem>>, vector<16x384xf32>,
    %c0_i32_8 = arith.constant 0 : i32
    %9 = arith.cmpi eq, %arg2, %c0_i32_8 : i32
    %10 = arith.extui %9 : i1 to i32
    %c0_i32_9 = arith.constant 0 : i32
    %11 = arith.cmpi ne, %10, %c0_i32_9 : i32
    scf.if %11 {
      %c0_10 = arith.constant 0 : index
      %c0_11 = arith.constant 0 : index
      %12 = vector.load %arg7[%c0_10, %c0_11] : memref<16x384xf32, #tpu.memory_space<vmem>>, vector<16x384xf32>
      %c0_12 = arith.constant 0 : index
      %c0_13 = arith.constant 0 : index
      %13 = vector.load %arg5[%c0_12, %c0_13] : memref<1x384xf32, #tpu.memory_space<vmem>>, vector<1x384xf32>
      %14 = vector.broadcast %13 : vector<1x384xf32> to vector<16x384xf32>
      %15 = arith.addf %12, %14 : vector<16x384xf32>
      %16 = arith.truncf %15 : vector<16x384xf32> to vector<16x384xbf16>
      %c0_14 = arith.constant 0 : index
      %c0_15 = arith.constant 0 : index
      %17 = vector.load %arg6[%c0_14, %c0_15] : memref<16x384xbf16, #tpu.memory_space<vmem>>, vector<16x384xbf16>
      tpu.vector_store %arg6[%c0_14, %c0_15], %16 {strides = array<i32>} : memref<16x384xbf16, #tpu.memory_space<vmem>>, vector<16x384xbf16>,
    } else {
    }
    return
  }
  func.func @transform_0(%arg0: i32, %arg1: i32, %arg2: i32) -> (i32, i32) {
    %c0_i32 = arith.constant 0 : i32
    return %arg0, %arg2 : i32, i32
  }
  func.func @transform_1(%arg0: i32, %arg1: i32, %arg2: i32) -> (i32, i32) {
    %c0_i32 = arith.constant 0 : i32
    return %arg2, %arg1 : i32, i32
  }
  func.func @transform_2(%arg0: i32, %arg1: i32, %arg2: i32) -> (i32, i32) {
    %c0_i32 = arith.constant 0 : i32
    %c0_i32_0 = arith.constant 0 : i32
    return %c0_i32, %arg1 : i32, i32
  }
  func.func @transform_3(%arg0: i32, %arg1: i32, %arg2: i32) -> (i32, i32) {
    %c0_i32 = arith.constant 0 : i32
    return %arg0, %arg1 : i32, i32
  }
}

module attributes {stable_mosaic.version = 11 : i64} {
  func.func @_layernorm_kernel(%arg0: i32, %arg1: memref<16x128xbf16, #tpu.memory_space<vmem>>, %arg2: memref<1x128xf32, #tpu.memory_space<vmem>>, %arg3: memref<1x128xf32, #tpu.memory_space<vmem>>, %arg4: memref<16x128xbf16, #tpu.memory_space<vmem>>) attributes {dimension_semantics = [#tpu.dimension_semantics<parallel>], iteration_bounds = array<i64: 1>, scalar_prefetch = 0 : i64, scratch_operands = 0 : i64, tpu.core_type = #tpu.core_type<tc>, window_params = [{transform_indices = @transform_0, window_bounds = array<i64: 16, 128>}, {pipeline_mode = #tpu.pipeline_mode<synchronous>, transform_indices = @transform_1, window_bounds = array<i64: 1, 128>}, {pipeline_mode = #tpu.pipeline_mode<synchronous>, transform_indices = @transform_2, window_bounds = array<i64: 1, 128>}, {transform_indices = @transform_3, window_bounds = array<i64: 16, 128>}]} {
    %c0 = arith.constant 0 : index
    %c0_0 = arith.constant 0 : index
    %0 = vector.load %arg1[%c0, %c0_0] : memref<16x128xbf16, #tpu.memory_space<vmem>>, vector<16x128xbf16>
    %1 = arith.extf %0 : vector<16x128xbf16> to vector<16x128xf32>
    %cst = arith.constant dense<0.000000e+00> : vector<16xf32>
    %2 = vector.multi_reduction <add>, %1, %cst [1] : vector<16x128xf32> to vector<16xf32>
    %3 = vector.shape_cast %2 : vector<16xf32> to vector<16x1xf32>
    %cst_1 = arith.constant 1.280000e+02 : f32
    %4 = vector.broadcast %cst_1 : f32 to vector<16x1xf32>
    %5 = arith.divf %3, %4 : vector<16x1xf32>
    %6 = vector.broadcast %5 : vector<16x1xf32> to vector<16x128xf32>
    %7 = arith.subf %1, %6 : vector<16x128xf32>
    %8 = arith.mulf %7, %7 : vector<16x128xf32>
    %cst_2 = arith.constant dense<0.000000e+00> : vector<16xf32>
    %9 = vector.multi_reduction <add>, %8, %cst_2 [1] : vector<16x128xf32> to vector<16xf32>
    %10 = vector.shape_cast %9 : vector<16xf32> to vector<16x1xf32>
    %cst_3 = arith.constant 1.280000e+02 : f32
    %11 = vector.broadcast %cst_3 : f32 to vector<16x1xf32>
    %12 = arith.divf %10, %11 : vector<16x1xf32>
    %cst_4 = arith.constant 9.99999996E-13 : f32
    %13 = vector.broadcast %cst_4 : f32 to vector<16x1xf32>
    %14 = arith.addf %12, %13 : vector<16x1xf32>
    %15 = math.rsqrt %14 : vector<16x1xf32>
    %16 = vector.broadcast %15 : vector<16x1xf32> to vector<16x128xf32>
    %17 = arith.mulf %7, %16 : vector<16x128xf32>
    %c0_5 = arith.constant 0 : index
    %c0_6 = arith.constant 0 : index
    %18 = vector.load %arg2[%c0_5, %c0_6] : memref<1x128xf32, #tpu.memory_space<vmem>>, vector<1x128xf32>
    %19 = vector.broadcast %18 : vector<1x128xf32> to vector<16x128xf32>
    %20 = arith.mulf %17, %19 : vector<16x128xf32>
    %c0_7 = arith.constant 0 : index
    %c0_8 = arith.constant 0 : index
    %21 = vector.load %arg3[%c0_7, %c0_8] : memref<1x128xf32, #tpu.memory_space<vmem>>, vector<1x128xf32>
    %22 = vector.broadcast %21 : vector<1x128xf32> to vector<16x128xf32>
    %23 = arith.addf %20, %22 : vector<16x128xf32>
    %24 = arith.truncf %23 : vector<16x128xf32> to vector<16x128xbf16>
    %c0_9 = arith.constant 0 : index
    %c0_10 = arith.constant 0 : index
    %25 = vector.load %arg4[%c0_9, %c0_10] : memref<16x128xbf16, #tpu.memory_space<vmem>>, vector<16x128xbf16>
    tpu.vector_store %arg4[%c0_9, %c0_10], %24 {strides = array<i32>} : memref<16x128xbf16, #tpu.memory_space<vmem>>, vector<16x128xbf16>,
    return
  }
  func.func @transform_0(%arg0: i32) -> (i32, i32) {
    %c0_i32 = arith.constant 0 : i32
    %c0_i32_0 = arith.constant 0 : i32
    return %arg0, %c0_i32 : i32, i32
  }
  func.func @transform_1(%arg0: i32) -> (i32, i32) {
    %c0_i32 = arith.constant 0 : i32
    %c0_i32_0 = arith.constant 0 : i32
    %c0_i32_1 = arith.constant 0 : i32
    return %c0_i32, %c0_i32_0 : i32, i32
  }
  func.func @transform_2(%arg0: i32) -> (i32, i32) {
    %c0_i32 = arith.constant 0 : i32
    %c0_i32_0 = arith.constant 0 : i32
    %c0_i32_1 = arith.constant 0 : i32
    return %c0_i32, %c0_i32_0 : i32, i32
  }
  func.func @transform_3(%arg0: i32) -> (i32, i32) {
    %c0_i32 = arith.constant 0 : i32
    %c0_i32_0 = arith.constant 0 : i32
    return %arg0, %c0_i32 : i32, i32
  }
}

module attributes {stable_mosaic.version = 11 : i64} {
  func.func @_attention_kernel(%arg0: i32, %arg1: i32, %arg2: memref<1x8x128xbf16, #tpu.memory_space<vmem>>, %arg3: memref<1x8x128xbf16, #tpu.memory_space<vmem>>, %arg4: memref<1x8x128xbf16, #tpu.memory_space<vmem>>, %arg5: memref<1x1x8xf32, #tpu.memory_space<vmem>>, %arg6: memref<1x8x128xbf16, #tpu.memory_space<vmem>>) attributes {dimension_semantics = [#tpu.dimension_semantics<parallel>, #tpu.dimension_semantics<parallel>], iteration_bounds = array<i64: 2, 1>, scalar_prefetch = 0 : i64, scratch_operands = 0 : i64, tpu.core_type = #tpu.core_type<tc>, window_params = [{transform_indices = @transform_0, window_bounds = array<i64: 1, 8, 128>}, {transform_indices = @transform_1, window_bounds = array<i64: 1, 8, 128>}, {transform_indices = @transform_2, window_bounds = array<i64: 1, 8, 128>}, {transform_indices = @transform_3, window_bounds = array<i64: 1, 1, 8>}, {transform_indices = @transform_4, window_bounds = array<i64: 1, 8, 128>}]} {
    %c0 = arith.constant 0 : index
    %c0_0 = arith.constant 0 : index
    %c0_1 = arith.constant 0 : index
    %0 = vector.load %arg2[%c0, %c0_0, %c0_1] : memref<1x8x128xbf16, #tpu.memory_space<vmem>>, vector<1x8x128xbf16>
    %1 = vector.shape_cast %0 : vector<1x8x128xbf16> to vector<8x128xbf16>
    %cst = arith.constant 1.250000e-01 : bf16
    %2 = vector.broadcast %cst : bf16 to vector<8x128xbf16>
    %3 = arith.mulf %1, %2 : vector<8x128xbf16>
    %c0_2 = arith.constant 0 : index
    %c0_3 = arith.constant 0 : index
    %c0_4 = arith.constant 0 : index
    %4 = vector.load %arg3[%c0_2, %c0_3, %c0_4] : memref<1x8x128xbf16, #tpu.memory_space<vmem>>, vector<1x8x128xbf16>
    %5 = vector.shape_cast %4 : vector<1x8x128xbf16> to vector<8x128xbf16>
    %c0_5 = arith.constant 0 : index
    %c0_6 = arith.constant 0 : index
    %c0_7 = arith.constant 0 : index
    %6 = vector.load %arg4[%c0_5, %c0_6, %c0_7] : memref<1x8x128xbf16, #tpu.memory_space<vmem>>, vector<1x8x128xbf16>
    %7 = vector.shape_cast %6 : vector<1x8x128xbf16> to vector<8x128xbf16>
    %c0_8 = arith.constant 0 : index
    %c0_9 = arith.constant 0 : index
    %c0_10 = arith.constant 0 : index
    %8 = vector.load %arg5[%c0_8, %c0_9, %c0_10] : memref<1x1x8xf32, #tpu.memory_space<vmem>>, vector<1x1x8xf32>
    %9 = vector.shape_cast %8 : vector<1x1x8xf32> to vector<1x8xf32>
    %10 = vector.extract_strided_slice %3 {offsets = [0, 0], sizes = [8, 64], strides = [1, 1]} : vector<8x128xbf16> to vector<8x64xbf16>
    %11 = vector.extract_strided_slice %5 {offsets = [0, 0], sizes = [8, 64], strides = [1, 1]} : vector<8x128xbf16> to vector<8x64xbf16>
    %12 = vector.extract_strided_slice %7 {offsets = [0, 0], sizes = [8, 64], strides = [1, 1]} : vector<8x128xbf16> to vector<8x64xbf16>
    "tpu.trace_start"() <{level = 10 : i32, message = "qd,kd->qk"}> : () -> ()
    %cst_11 = arith.constant dense<0.000000e+00> : vector<8x8xf32>
    %13 = tpu.matmul %10, %11, %cst_11 {dimension_numbers = #tpu.dot_dimension_numbers<[1], [1], [0], [0], [0, 0, 1, 0], [], []>} : vector<8x64xbf16>, vector<8x64xbf16>, vector<8x8xf32> -> vector<8x8xf32>
    "tpu.trace_stop"() : () -> ()
    %14 = vector.broadcast %9 : vector<1x8xf32> to vector<8x8xf32>
    %15 = arith.addf %13, %14 : vector<8x8xf32>
    %cst_12 = arith.constant dense<0xFF800000> : vector<8xf32>
    %16 = vector.multi_reduction <maximumf>, %15, %cst_12 [1] : vector<8x8xf32> to vector<8xf32>
    %17 = vector.shape_cast %16 : vector<8xf32> to vector<8x1xf32>
    %18 = vector.broadcast %17 : vector<8x1xf32> to vector<8x8xf32>
    %19 = arith.subf %15, %18 : vector<8x8xf32>
    %20 = math.exp %19 : vector<8x8xf32>
    %cst_13 = arith.constant dense<0.000000e+00> : vector<8xf32>
    %21 = vector.multi_reduction <add>, %20, %cst_13 [1] : vector<8x8xf32> to vector<8xf32>
    %22 = vector.shape_cast %21 : vector<8xf32> to vector<8x1xf32>
    %23 = tpu.reciprocal %22 {approx = true} : vector<8x1xf32> -> vector<8x1xf32>
    %24 = vector.broadcast %23 : vector<8x1xf32> to vector<8x8xf32>
    %25 = arith.mulf %20, %24 : vector<8x8xf32>
    %26 = arith.truncf %25 : vector<8x8xf32> to vector<8x8xbf16>
    %cst_14 = arith.constant dense<0.000000e+00> : vector<8x64xf32>
    %27 = tpu.matmul %26, %12, %cst_14 {dimension_numbers = #tpu.dot_dimension_numbers<[1], [0], [0], [1], [0, 0, 1, 1], [], []>} : vector<8x8xbf16>, vector<8x64xbf16>, vector<8x64xf32> -> vector<8x64xf32>
    %28 = vector.extract_strided_slice %3 {offsets = [0, 64], sizes = [8, 64], strides = [1, 1]} : vector<8x128xbf16> to vector<8x64xbf16>
    %29 = vector.extract_strided_slice %5 {offsets = [0, 64], sizes = [8, 64], strides = [1, 1]} : vector<8x128xbf16> to vector<8x64xbf16>
    %30 = vector.extract_strided_slice %7 {offsets = [0, 64], sizes = [8, 64], strides = [1, 1]} : vector<8x128xbf16> to vector<8x64xbf16>
    "tpu.trace_start"() <{level = 10 : i32, message = "qd,kd->qk"}> : () -> ()
    %cst_15 = arith.constant dense<0.000000e+00> : vector<8x8xf32>
    %31 = tpu.matmul %28, %29, %cst_15 {dimension_numbers = #tpu.dot_dimension_numbers<[1], [1], [0], [0], [0, 0, 1, 0], [], []>} : vector<8x64xbf16>, vector<8x64xbf16>, vector<8x8xf32> -> vector<8x8xf32>
    "tpu.trace_stop"() : () -> ()
    %32 = vector.broadcast %9 : vector<1x8xf32> to vector<8x8xf32>
    %33 = arith.addf %31, %32 : vector<8x8xf32>
    %cst_16 = arith.constant dense<0xFF800000> : vector<8xf32>
    %34 = vector.multi_reduction <maximumf>, %33, %cst_16 [1] : vector<8x8xf32> to vector<8xf32>
    %35 = vector.shape_cast %34 : vector<8xf32> to vector<8x1xf32>
    %36 = vector.broadcast %35 : vector<8x1xf32> to vector<8x8xf32>
    %37 = arith.subf %33, %36 : vector<8x8xf32>
    %38 = math.exp %37 : vector<8x8xf32>
    %cst_17 = arith.constant dense<0.000000e+00> : vector<8xf32>
    %39 = vector.multi_reduction <add>, %38, %cst_17 [1] : vector<8x8xf32> to vector<8xf32>
    %40 = vector.shape_cast %39 : vector<8xf32> to vector<8x1xf32>
    %41 = tpu.reciprocal %40 {approx = true} : vector<8x1xf32> -> vector<8x1xf32>
    %42 = vector.broadcast %41 : vector<8x1xf32> to vector<8x8xf32>
    %43 = arith.mulf %38, %42 : vector<8x8xf32>
    %44 = arith.truncf %43 : vector<8x8xf32> to vector<8x8xbf16>
    %cst_18 = arith.constant dense<0.000000e+00> : vector<8x64xf32>
    %45 = tpu.matmul %44, %30, %cst_18 {dimension_numbers = #tpu.dot_dimension_numbers<[1], [0], [0], [1], [0, 0, 1, 1], [], []>} : vector<8x8xbf16>, vector<8x64xbf16>, vector<8x64xf32> -> vector<8x64xf32>
    %46 = tpu.concatenate %27, %45 in 1 : vector<8x64xf32>, vector<8x64xf32> -> vector<8x128xf32>
    %47 = arith.truncf %46 : vector<8x128xf32> to vector<8x128xbf16>
    %c0_19 = arith.constant 0 : index
    %c0_20 = arith.constant 0 : index
    %c0_21 = arith.constant 0 : index
    %48 = vector.load %arg6[%c0_19, %c0_20, %c0_21] : memref<1x8x128xbf16, #tpu.memory_space<vmem>>, vector<1x8x128xbf16>
    %49 = vector.shape_cast %48 : vector<1x8x128xbf16> to vector<8x128xbf16>
    %50 = vector.shape_cast %47 : vector<8x128xbf16> to vector<1x8x128xbf16>
    tpu.vector_store %arg6[%c0_19, %c0_20, %c0_21], %50 {strides = array<i32>} : memref<1x8x128xbf16, #tpu.memory_space<vmem>>, vector<1x8x128xbf16>,
    return
  }
  func.func @transform_0(%arg0: i32, %arg1: i32) -> (i32, i32, i32) {
    %c0_i32 = arith.constant 0 : i32
    %c0_i32_0 = arith.constant 0 : i32
    return %arg0, %c0_i32, %arg1 : i32, i32, i32
  }
  func.func @transform_1(%arg0: i32, %arg1: i32) -> (i32, i32, i32) {
    %c1_i32 = arith.constant 1 : i32
    %0 = arith.addi %arg1, %c1_i32 : i32
    %c0_i32 = arith.constant 0 : i32
    %c0_i32_0 = arith.constant 0 : i32
    return %arg0, %c0_i32, %0 : i32, i32, i32
  }
  func.func @transform_2(%arg0: i32, %arg1: i32) -> (i32, i32, i32) {
    %c2_i32 = arith.constant 2 : i32
    %0 = arith.addi %arg1, %c2_i32 : i32
    %c0_i32 = arith.constant 0 : i32
    %c0_i32_0 = arith.constant 0 : i32
    return %arg0, %c0_i32, %0 : i32, i32, i32
  }
  func.func @transform_3(%arg0: i32, %arg1: i32) -> (i32, i32, i32) {
    %c0_i32 = arith.constant 0 : i32
    %c0_i32_0 = arith.constant 0 : i32
    %c0_i32_1 = arith.constant 0 : i32
    return %arg0, %c0_i32, %c0_i32_0 : i32, i32, i32
  }
  func.func @transform_4(%arg0: i32, %arg1: i32) -> (i32, i32, i32) {
    %c0_i32 = arith.constant 0 : i32
    %c0_i32_0 = arith.constant 0 : i32
    return %arg0, %c0_i32, %arg1 : i32, i32, i32
  }
}

module attributes {stable_mosaic.version = 11 : i64} {
  func.func @_linear_kernel(%arg0: i32, %arg1: i32, %arg2: i32, %arg3: memref<16x128xbf16, #tpu.memory_space<vmem>>, %arg4: memref<128x128xbf16, #tpu.memory_space<vmem>>, %arg5: memref<1x128xf32, #tpu.memory_space<vmem>>, %arg6: memref<16x128xbf16, #tpu.memory_space<vmem>>, %arg7: memref<1x128xf32, #tpu.memory_space<vmem>>, %arg8: memref<1x128xf32, #tpu.memory_space<vmem>>, %arg9: memref<16x128xbf16, #tpu.memory_space<vmem>>, %arg10: memref<16x128xf32, #tpu.memory_space<vmem>>) attributes {dimension_semantics = [#tpu.dimension_semantics<parallel>, #tpu.dimension_semantics<parallel>, #tpu.dimension_semantics<arbitrary>], iteration_bounds = array<i64: 1, 1, 1>, scalar_prefetch = 0 : i64, scratch_operands = 1 : i64, tpu.core_type = #tpu.core_type<tc>, window_params = [{transform_indices = @transform_0, window_bounds = array<i64: 16, 128>}, {transform_indices = @transform_1, window_bounds = array<i64: 128, 128>}, {transform_indices = @transform_2, window_bounds = array<i64: 1, 128>}, {transform_indices = @transform_3, window_bounds = array<i64: 16, 128>}, {pipeline_mode = #tpu.pipeline_mode<synchronous>, transform_indices = @transform_4, window_bounds = array<i64: 1, 128>}, {pipeline_mode = #tpu.pipeline_mode<synchronous>, transform_indices = @transform_5, window_bounds = array<i64: 1, 128>}, {transform_indices = @transform_6, window_bounds = array<i64: 16, 128>}]} {
    %c0_i32 = arith.constant 0 : i32
    %0 = arith.cmpi eq, %arg2, %c0_i32 : i32
    %1 = arith.extui %0 : i1 to i32
    %c0_i32_0 = arith.constant 0 : i32
    %2 = arith.cmpi ne, %1, %c0_i32_0 : i32
    scf.if %2 {
      %cst_10 = arith.constant 0.000000e+00 : f32
      %12 = vector.broadcast %cst_10 : f32 to vector<16x128xf32>
      %c0_11 = arith.constant 0 : index
      %c0_12 = arith.constant 0 : index
      %13 = vector.load %arg10[%c0_11, %c0_12] : memref<16x128xf32, #tpu.memory_space<vmem>>, vector<16x128xf32>
      tpu.vector_store %arg10[%c0_11, %c0_12], %12 {strides = array<i32>} : memref<16x128xf32, #tpu.memory_space<vmem>>, vector<16x128xf32>,
    } else {
    }
    %c0 = arith.constant 0 : index
    %c0_1 = arith.constant 0 : index
    %3 = vector.load %arg10[%c0, %c0_1] : memref<16x128xf32, #tpu.memory_space<vmem>>, vector<16x128xf32>
    %c0_2 = arith.constant 0 : index
    %c0_3 = arith.constant 0 : index
    %4 = vector.load %arg3[%c0_2, %c0_3] : memref<16x128xbf16, #tpu.memory_space<vmem>>, vector<16x128xbf16>
    %c0_4 = arith.constant 0 : index
    %c0_5 = arith.constant 0 : index
    %5 = vector.load %arg4[%c0_4, %c0_5] : memref<128x128xbf16, #tpu.memory_space<vmem>>, vector<128x128xbf16>
    %cst = arith.constant dense<0.000000e+00> : vector<16x128xf32>
    %6 = tpu.matmul %4, %5, %cst {dimension_numbers = #tpu.dot_dimension_numbers<[1], [0], [0], [1], [0, 0, 1, 1], [], []>} : vector<16x128xbf16>, vector<128x128xbf16>, vector<16x128xf32> -> vector<16x128xf32>
    %7 = arith.addf %3, %6 : vector<16x128xf32>
    %c0_6 = arith.constant 0 : index
    %c0_7 = arith.constant 0 : index
    %8 = vector.load %arg10[%c0_6, %c0_7] : memref<16x128xf32, #tpu.memory_space<vmem>>, vector<16x128xf32>
    tpu.vector_store %arg10[%c0_6, %c0_7], %7 {strides = array<i32>} : memref<16x128xf32, #tpu.memory_space<vmem>>, vector<16x128xf32>,
    %c0_i32_8 = arith.constant 0 : i32
    %9 = arith.cmpi eq, %arg2, %c0_i32_8 : i32
    %10 = arith.extui %9 : i1 to i32
    %c0_i32_9 = arith.constant 0 : i32
    %11 = arith.cmpi ne, %10, %c0_i32_9 : i32
    scf.if %11 {
      %c0_10 = arith.constant 0 : index
      %c0_11 = arith.constant 0 : index
      %12 = vector.load %arg10[%c0_10, %c0_11] : memref<16x128xf32, #tpu.memory_space<vmem>>, vector<16x128xf32>
      %c0_12 = arith.constant 0 : index
      %c0_13 = arith.constant 0 : index
      %13 = vector.load %arg5[%c0_12, %c0_13] : memref<1x128xf32, #tpu.memory_space<vmem>>, vector<1x128xf32>
      %14 = vector.broadcast %13 : vector<1x128xf32> to vector<16x128xf32>
      %15 = arith.addf %12, %14 : vector<16x128xf32>
      %c0_14 = arith.constant 0 : index
      %c0_15 = arith.constant 0 : index
      %16 = vector.load %arg6[%c0_14, %c0_15] : memref<16x128xbf16, #tpu.memory_space<vmem>>, vector<16x128xbf16>
      %17 = arith.extf %16 : vector<16x128xbf16> to vector<16x128xf32>
      %18 = arith.addf %15, %17 : vector<16x128xf32>
      %cst_16 = arith.constant dense<0.000000e+00> : vector<16xf32>
      %19 = vector.multi_reduction <add>, %18, %cst_16 [1] : vector<16x128xf32> to vector<16xf32>
      %20 = vector.shape_cast %19 : vector<16xf32> to vector<16x1xf32>
      %cst_17 = arith.constant 1.280000e+02 : f32
      %21 = vector.broadcast %cst_17 : f32 to vector<16x1xf32>
      %22 = arith.divf %20, %21 : vector<16x1xf32>
      %23 = vector.broadcast %22 : vector<16x1xf32> to vector<16x128xf32>
      %24 = arith.subf %18, %23 : vector<16x128xf32>
      %25 = arith.mulf %24, %24 : vector<16x128xf32>
      %cst_18 = arith.constant dense<0.000000e+00> : vector<16xf32>
      %26 = vector.multi_reduction <add>, %25, %cst_18 [1] : vector<16x128xf32> to vector<16xf32>
      %27 = vector.shape_cast %26 : vector<16xf32> to vector<16x1xf32>
      %cst_19 = arith.constant 1.280000e+02 : f32
      %28 = vector.broadcast %cst_19 : f32 to vector<16x1xf32>
      %29 = arith.divf %27, %28 : vector<16x1xf32>
      %cst_20 = arith.constant 9.99999996E-13 : f32
      %30 = vector.broadcast %cst_20 : f32 to vector<16x1xf32>
      %31 = arith.addf %29, %30 : vector<16x1xf32>
      %32 = math.rsqrt %31 : vector<16x1xf32>
      %33 = vector.broadcast %32 : vector<16x1xf32> to vector<16x128xf32>
      %34 = arith.mulf %24, %33 : vector<16x128xf32>
      %c0_21 = arith.constant 0 : index
      %c0_22 = arith.constant 0 : index
      %35 = vector.load %arg7[%c0_21, %c0_22] : memref<1x128xf32, #tpu.memory_space<vmem>>, vector<1x128xf32>
      %36 = vector.broadcast %35 : vector<1x128xf32> to vector<16x128xf32>
      %37 = arith.mulf %34, %36 : vector<16x128xf32>
      %c0_23 = arith.constant 0 : index
      %c0_24 = arith.constant 0 : index
      %38 = vector.load %arg8[%c0_23, %c0_24] : memref<1x128xf32, #tpu.memory_space<vmem>>, vector<1x128xf32>
      %39 = vector.broadcast %38 : vector<1x128xf32> to vector<16x128xf32>
      %40 = arith.addf %37, %39 : vector<16x128xf32>
      %41 = arith.truncf %40 : vector<16x128xf32> to vector<16x128xbf16>
      %c0_25 = arith.constant 0 : index
      %c0_26 = arith.constant 0 : index
      %42 = vector.load %arg9[%c0_25, %c0_26] : memref<16x128xbf16, #tpu.memory_space<vmem>>, vector<16x128xbf16>
      tpu.vector_store %arg9[%c0_25, %c0_26], %41 {strides = array<i32>} : memref<16x128xbf16, #tpu.memory_space<vmem>>, vector<16x128xbf16>,
    } else {
    }
    return
  }
  func.func @transform_0(%arg0: i32, %arg1: i32, %arg2: i32) -> (i32, i32) {
    %c0_i32 = arith.constant 0 : i32
    return %arg0, %arg2 : i32, i32
  }
  func.func @transform_1(%arg0: i32, %arg1: i32, %arg2: i32) -> (i32, i32) {
    %c0_i32 = arith.constant 0 : i32
    return %arg2, %arg1 : i32, i32
  }
  func.func @transform_2(%arg0: i32, %arg1: i32, %arg2: i32) -> (i32, i32) {
    %c0_i32 = arith.constant 0 : i32
    %c0_i32_0 = arith.constant 0 : i32
    return %c0_i32, %arg1 : i32, i32
  }
  func.func @transform_3(%arg0: i32, %arg1: i32, %arg2: i32) -> (i32, i32) {
    %c0_i32 = arith.constant 0 : i32
    %c0_i32_0 = arith.constant 0 : i32
    return %arg0, %c0_i32 : i32, i32
  }
  func.func @transform_4(%arg0: i32, %arg1: i32, %arg2: i32) -> (i32, i32) {
    %c0_i32 = arith.constant 0 : i32
    %c0_i32_0 = arith.constant 0 : i32
    %c0_i32_1 = arith.constant 0 : i32
    return %c0_i32, %c0_i32_0 : i32, i32
  }
  func.func @transform_5(%arg0: i32, %arg1: i32, %arg2: i32) -> (i32, i32) {
    %c0_i32 = arith.constant 0 : i32
    %c0_i32_0 = arith.constant 0 : i32
    %c0_i32_1 = arith.constant 0 : i32
    return %c0_i32, %c0_i32_0 : i32, i32
  }
  func.func @transform_6(%arg0: i32, %arg1: i32, %arg2: i32) -> (i32, i32) {
    %c0_i32 = arith.constant 0 : i32
    return %arg0, %arg1 : i32, i32
  }
}

module attributes {stable_mosaic.version = 11 : i64} {
  func.func @_linear_kernel(%arg0: i32, %arg1: i32, %arg2: i32, %arg3: memref<16x128xbf16, #tpu.memory_space<vmem>>, %arg4: memref<128x512xbf16, #tpu.memory_space<vmem>>, %arg5: memref<1x512xf32, #tpu.memory_space<vmem>>, %arg6: memref<16x512xbf16, #tpu.memory_space<vmem>>, %arg7: memref<16x512xf32, #tpu.memory_space<vmem>>) attributes {dimension_semantics = [#tpu.dimension_semantics<parallel>, #tpu.dimension_semantics<parallel>, #tpu.dimension_semantics<arbitrary>], iteration_bounds = array<i64: 1, 1, 1>, scalar_prefetch = 0 : i64, scratch_operands = 1 : i64, tpu.core_type = #tpu.core_type<tc>, window_params = [{transform_indices = @transform_0, window_bounds = array<i64: 16, 128>}, {transform_indices = @transform_1, window_bounds = array<i64: 128, 512>}, {transform_indices = @transform_2, window_bounds = array<i64: 1, 512>}, {transform_indices = @transform_3, window_bounds = array<i64: 16, 512>}]} {
    %c0_i32 = arith.constant 0 : i32
    %0 = arith.cmpi eq, %arg2, %c0_i32 : i32
    %1 = arith.extui %0 : i1 to i32
    %c0_i32_0 = arith.constant 0 : i32
    %2 = arith.cmpi ne, %1, %c0_i32_0 : i32
    scf.if %2 {
      %cst_10 = arith.constant 0.000000e+00 : f32
      %12 = vector.broadcast %cst_10 : f32 to vector<16x512xf32>
      %c0_11 = arith.constant 0 : index
      %c0_12 = arith.constant 0 : index
      %13 = vector.load %arg7[%c0_11, %c0_12] : memref<16x512xf32, #tpu.memory_space<vmem>>, vector<16x512xf32>
      tpu.vector_store %arg7[%c0_11, %c0_12], %12 {strides = array<i32>} : memref<16x512xf32, #tpu.memory_space<vmem>>, vector<16x512xf32>,
    } else {
    }
    %c0 = arith.constant 0 : index
    %c0_1 = arith.constant 0 : index
    %3 = vector.load %arg7[%c0, %c0_1] : memref<16x512xf32, #tpu.memory_space<vmem>>, vector<16x512xf32>
    %c0_2 = arith.constant 0 : index
    %c0_3 = arith.constant 0 : index
    %4 = vector.load %arg3[%c0_2, %c0_3] : memref<16x128xbf16, #tpu.memory_space<vmem>>, vector<16x128xbf16>
    %c0_4 = arith.constant 0 : index
    %c0_5 = arith.constant 0 : index
    %5 = vector.load %arg4[%c0_4, %c0_5] : memref<128x512xbf16, #tpu.memory_space<vmem>>, vector<128x512xbf16>
    %cst = arith.constant dense<0.000000e+00> : vector<16x512xf32>
    %6 = tpu.matmul %4, %5, %cst {dimension_numbers = #tpu.dot_dimension_numbers<[1], [0], [0], [1], [0, 0, 1, 1], [], []>} : vector<16x128xbf16>, vector<128x512xbf16>, vector<16x512xf32> -> vector<16x512xf32>
    %7 = arith.addf %3, %6 : vector<16x512xf32>
    %c0_6 = arith.constant 0 : index
    %c0_7 = arith.constant 0 : index
    %8 = vector.load %arg7[%c0_6, %c0_7] : memref<16x512xf32, #tpu.memory_space<vmem>>, vector<16x512xf32>
    tpu.vector_store %arg7[%c0_6, %c0_7], %7 {strides = array<i32>} : memref<16x512xf32, #tpu.memory_space<vmem>>, vector<16x512xf32>,
    %c0_i32_8 = arith.constant 0 : i32
    %9 = arith.cmpi eq, %arg2, %c0_i32_8 : i32
    %10 = arith.extui %9 : i1 to i32
    %c0_i32_9 = arith.constant 0 : i32
    %11 = arith.cmpi ne, %10, %c0_i32_9 : i32
    scf.if %11 {
      %c0_10 = arith.constant 0 : index
      %c0_11 = arith.constant 0 : index
      %12 = vector.load %arg7[%c0_10, %c0_11] : memref<16x512xf32, #tpu.memory_space<vmem>>, vector<16x512xf32>
      %c0_12 = arith.constant 0 : index
      %c0_13 = arith.constant 0 : index
      %13 = vector.load %arg5[%c0_12, %c0_13] : memref<1x512xf32, #tpu.memory_space<vmem>>, vector<1x512xf32>
      %14 = vector.broadcast %13 : vector<1x512xf32> to vector<16x512xf32>
      %15 = arith.addf %12, %14 : vector<16x512xf32>
      %cst_14 = arith.constant 5.000000e-01 : f32
      %16 = vector.broadcast %cst_14 : f32 to vector<16x512xf32>
      %17 = arith.mulf %16, %15 : vector<16x512xf32>
      %cst_15 = arith.constant 0.707106769 : f32
      %18 = vector.broadcast %cst_15 : f32 to vector<16x512xf32>
      %19 = arith.mulf %15, %18 : vector<16x512xf32>
      %20 = math.erf %19 : vector<16x512xf32>
      %cst_16 = arith.constant 1.000000e+00 : f32
      %21 = vector.broadcast %cst_16 : f32 to vector<16x512xf32>
      %22 = arith.addf %21, %20 : vector<16x512xf32>
      %23 = arith.mulf %17, %22 : vector<16x512xf32>
      %24 = arith.truncf %23 : vector<16x512xf32> to vector<16x512xbf16>
      %c0_17 = arith.constant 0 : index
      %c0_18 = arith.constant 0 : index
      %25 = vector.load %arg6[%c0_17, %c0_18] : memref<16x512xbf16, #tpu.memory_space<vmem>>, vector<16x512xbf16>
      tpu.vector_store %arg6[%c0_17, %c0_18], %24 {strides = array<i32>} : memref<16x512xbf16, #tpu.memory_space<vmem>>, vector<16x512xbf16>,
    } else {
    }
    return
  }
  func.func @transform_0(%arg0: i32, %arg1: i32, %arg2: i32) -> (i32, i32) {
    %c0_i32 = arith.constant 0 : i32
    return %arg0, %arg2 : i32, i32
  }
  func.func @transform_1(%arg0: i32, %arg1: i32, %arg2: i32) -> (i32, i32) {
    %c0_i32 = arith.constant 0 : i32
    return %arg2, %arg1 : i32, i32
  }
  func.func @transform_2(%arg0: i32, %arg1: i32, %arg2: i32) -> (i32, i32) {
    %c0_i32 = arith.constant 0 : i32
    %c0_i32_0 = arith.constant 0 : i32
    return %c0_i32, %arg1 : i32, i32
  }
  func.func @transform_3(%arg0: i32, %arg1: i32, %arg2: i32) -> (i32, i32) {
    %c0_i32 = arith.constant 0 : i32
    return %arg0, %arg1 : i32, i32
  }
}

module attributes {stable_mosaic.version = 11 : i64} {
  func.func @_linear_kernel(%arg0: i32, %arg1: i32, %arg2: i32, %arg3: memref<16x512xbf16, #tpu.memory_space<vmem>>, %arg4: memref<512x128xbf16, #tpu.memory_space<vmem>>, %arg5: memref<1x128xf32, #tpu.memory_space<vmem>>, %arg6: memref<16x128xbf16, #tpu.memory_space<vmem>>, %arg7: memref<1x128xf32, #tpu.memory_space<vmem>>, %arg8: memref<1x128xf32, #tpu.memory_space<vmem>>, %arg9: memref<16x128xbf16, #tpu.memory_space<vmem>>, %arg10: memref<16x128xf32, #tpu.memory_space<vmem>>) attributes {dimension_semantics = [#tpu.dimension_semantics<parallel>, #tpu.dimension_semantics<parallel>, #tpu.dimension_semantics<arbitrary>], iteration_bounds = array<i64: 1, 1, 1>, scalar_prefetch = 0 : i64, scratch_operands = 1 : i64, tpu.core_type = #tpu.core_type<tc>, window_params = [{transform_indices = @transform_0, window_bounds = array<i64: 16, 512>}, {transform_indices = @transform_1, window_bounds = array<i64: 512, 128>}, {transform_indices = @transform_2, window_bounds = array<i64: 1, 128>}, {transform_indices = @transform_3, window_bounds = array<i64: 16, 128>}, {pipeline_mode = #tpu.pipeline_mode<synchronous>, transform_indices = @transform_4, window_bounds = array<i64: 1, 128>}, {pipeline_mode = #tpu.pipeline_mode<synchronous>, transform_indices = @transform_5, window_bounds = array<i64: 1, 128>}, {transform_indices = @transform_6, window_bounds = array<i64: 16, 128>}]} {
    %c0_i32 = arith.constant 0 : i32
    %0 = arith.cmpi eq, %arg2, %c0_i32 : i32
    %1 = arith.extui %0 : i1 to i32
    %c0_i32_0 = arith.constant 0 : i32
    %2 = arith.cmpi ne, %1, %c0_i32_0 : i32
    scf.if %2 {
      %cst_10 = arith.constant 0.000000e+00 : f32
      %12 = vector.broadcast %cst_10 : f32 to vector<16x128xf32>
      %c0_11 = arith.constant 0 : index
      %c0_12 = arith.constant 0 : index
      %13 = vector.load %arg10[%c0_11, %c0_12] : memref<16x128xf32, #tpu.memory_space<vmem>>, vector<16x128xf32>
      tpu.vector_store %arg10[%c0_11, %c0_12], %12 {strides = array<i32>} : memref<16x128xf32, #tpu.memory_space<vmem>>, vector<16x128xf32>,
    } else {
    }
    %c0 = arith.constant 0 : index
    %c0_1 = arith.constant 0 : index
    %3 = vector.load %arg10[%c0, %c0_1] : memref<16x128xf32, #tpu.memory_space<vmem>>, vector<16x128xf32>
    %c0_2 = arith.constant 0 : index
    %c0_3 = arith.constant 0 : index
    %4 = vector.load %arg3[%c0_2, %c0_3] : memref<16x512xbf16, #tpu.memory_space<vmem>>, vector<16x512xbf16>
    %c0_4 = arith.constant 0 : index
    %c0_5 = arith.constant 0 : index
    %5 = vector.load %arg4[%c0_4, %c0_5] : memref<512x128xbf16, #tpu.memory_space<vmem>>, vector<512x128xbf16>
    %cst = arith.constant dense<0.000000e+00> : vector<16x128xf32>
    %6 = tpu.matmul %4, %5, %cst {dimension_numbers = #tpu.dot_dimension_numbers<[1], [0], [0], [1], [0, 0, 1, 1], [], []>} : vector<16x512xbf16>, vector<512x128xbf16>, vector<16x128xf32> -> vector<16x128xf32>
    %7 = arith.addf %3, %6 : vector<16x128xf32>
    %c0_6 = arith.constant 0 : index
    %c0_7 = arith.constant 0 : index
    %8 = vector.load %arg10[%c0_6, %c0_7] : memref<16x128xf32, #tpu.memory_space<vmem>>, vector<16x128xf32>
    tpu.vector_store %arg10[%c0_6, %c0_7], %7 {strides = array<i32>} : memref<16x128xf32, #tpu.memory_space<vmem>>, vector<16x128xf32>,
    %c0_i32_8 = arith.constant 0 : i32
    %9 = arith.cmpi eq, %arg2, %c0_i32_8 : i32
    %10 = arith.extui %9 : i1 to i32
    %c0_i32_9 = arith.constant 0 : i32
    %11 = arith.cmpi ne, %10, %c0_i32_9 : i32
    scf.if %11 {
      %c0_10 = arith.constant 0 : index
      %c0_11 = arith.constant 0 : index
      %12 = vector.load %arg10[%c0_10, %c0_11] : memref<16x128xf32, #tpu.memory_space<vmem>>, vector<16x128xf32>
      %c0_12 = arith.constant 0 : index
      %c0_13 = arith.constant 0 : index
      %13 = vector.load %arg5[%c0_12, %c0_13] : memref<1x128xf32, #tpu.memory_space<vmem>>, vector<1x128xf32>
      %14 = vector.broadcast %13 : vector<1x128xf32> to vector<16x128xf32>
      %15 = arith.addf %12, %14 : vector<16x128xf32>
      %c0_14 = arith.constant 0 : index
      %c0_15 = arith.constant 0 : index
      %16 = vector.load %arg6[%c0_14, %c0_15] : memref<16x128xbf16, #tpu.memory_space<vmem>>, vector<16x128xbf16>
      %17 = arith.extf %16 : vector<16x128xbf16> to vector<16x128xf32>
      %18 = arith.addf %15, %17 : vector<16x128xf32>
      %cst_16 = arith.constant dense<0.000000e+00> : vector<16xf32>
      %19 = vector.multi_reduction <add>, %18, %cst_16 [1] : vector<16x128xf32> to vector<16xf32>
      %20 = vector.shape_cast %19 : vector<16xf32> to vector<16x1xf32>
      %cst_17 = arith.constant 1.280000e+02 : f32
      %21 = vector.broadcast %cst_17 : f32 to vector<16x1xf32>
      %22 = arith.divf %20, %21 : vector<16x1xf32>
      %23 = vector.broadcast %22 : vector<16x1xf32> to vector<16x128xf32>
      %24 = arith.subf %18, %23 : vector<16x128xf32>
      %25 = arith.mulf %24, %24 : vector<16x128xf32>
      %cst_18 = arith.constant dense<0.000000e+00> : vector<16xf32>
      %26 = vector.multi_reduction <add>, %25, %cst_18 [1] : vector<16x128xf32> to vector<16xf32>
      %27 = vector.shape_cast %26 : vector<16xf32> to vector<16x1xf32>
      %cst_19 = arith.constant 1.280000e+02 : f32
      %28 = vector.broadcast %cst_19 : f32 to vector<16x1xf32>
      %29 = arith.divf %27, %28 : vector<16x1xf32>
      %cst_20 = arith.constant 9.99999996E-13 : f32
      %30 = vector.broadcast %cst_20 : f32 to vector<16x1xf32>
      %31 = arith.addf %29, %30 : vector<16x1xf32>
      %32 = math.rsqrt %31 : vector<16x1xf32>
      %33 = vector.broadcast %32 : vector<16x1xf32> to vector<16x128xf32>
      %34 = arith.mulf %24, %33 : vector<16x128xf32>
      %c0_21 = arith.constant 0 : index
      %c0_22 = arith.constant 0 : index
      %35 = vector.load %arg7[%c0_21, %c0_22] : memref<1x128xf32, #tpu.memory_space<vmem>>, vector<1x128xf32>
      %36 = vector.broadcast %35 : vector<1x128xf32> to vector<16x128xf32>
      %37 = arith.mulf %34, %36 : vector<16x128xf32>
      %c0_23 = arith.constant 0 : index
      %c0_24 = arith.constant 0 : index
      %38 = vector.load %arg8[%c0_23, %c0_24] : memref<1x128xf32, #tpu.memory_space<vmem>>, vector<1x128xf32>
      %39 = vector.broadcast %38 : vector<1x128xf32> to vector<16x128xf32>
      %40 = arith.addf %37, %39 : vector<16x128xf32>
      %41 = arith.truncf %40 : vector<16x128xf32> to vector<16x128xbf16>
      %c0_25 = arith.constant 0 : index
      %c0_26 = arith.constant 0 : index
      %42 = vector.load %arg9[%c0_25, %c0_26] : memref<16x128xbf16, #tpu.memory_space<vmem>>, vector<16x128xbf16>
      tpu.vector_store %arg9[%c0_25, %c0_26], %41 {strides = array<i32>} : memref<16x128xbf16, #tpu.memory_space<vmem>>, vector<16x128xbf16>,
    } else {
    }
    return
  }
  func.func @transform_0(%arg0: i32, %arg1: i32, %arg2: i32) -> (i32, i32) {
    %c0_i32 = arith.constant 0 : i32
    return %arg0, %arg2 : i32, i32
  }
  func.func @transform_1(%arg0: i32, %arg1: i32, %arg2: i32) -> (i32, i32) {
    %c0_i32 = arith.constant 0 : i32
    return %arg2, %arg1 : i32, i32
  }
  func.func @transform_2(%arg0: i32, %arg1: i32, %arg2: i32) -> (i32, i32) {
    %c0_i32 = arith.constant 0 : i32
    %c0_i32_0 = arith.constant 0 : i32
    return %c0_i32, %arg1 : i32, i32
  }
  func.func @transform_3(%arg0: i32, %arg1: i32, %arg2: i32) -> (i32, i32) {
    %c0_i32 = arith.constant 0 : i32
    %c0_i32_0 = arith.constant 0 : i32
    return %arg0, %c0_i32 : i32, i32
  }
  func.func @transform_4(%arg0: i32, %arg1: i32, %arg2: i32) -> (i32, i32) {
    %c0_i32 = arith.constant 0 : i32
    %c0_i32_0 = arith.constant 0 : i32
    %c0_i32_1 = arith.constant 0 : i32
    return %c0_i32, %c0_i32_0 : i32, i32
  }
  func.func @transform_5(%arg0: i32, %arg1: i32, %arg2: i32) -> (i32, i32) {
    %c0_i32 = arith.constant 0 : i32
    %c0_i32_0 = arith.constant 0 : i32
    %c0_i32_1 = arith.constant 0 : i32
    return %c0_i32, %c0_i32_0 : i32, i32
  }
  func.func @transform_6(%arg0: i32, %arg1: i32, %arg2: i32) -> (i32, i32) {
    %c0_i32 = arith.constant 0 : i32
    return %arg0, %arg1 : i32, i32
  }
}

</mosaic_0001>

<llo_original>
// kernel: kb_wic_forward.11
$region0: #{kb_wic_forward.11}
  #allocation0 [shape = 'u32[]', space=smem, size = 0x4, offset = 0x4, fixed_abs, tag = 'smem constant byte address 0x4 - core index']
  #allocation1 [shape = 'u32[144,128]{1,0:T(1,128)}', space=vmem, size = 0x12000, scoped, tag = 'internal scratch']
  %s0 = inlined_call_operand.vmem [shape: bf16[16,128], index: 0, kind: input, shape index: {}]
  %s1 = inlined_call_operand.vmem [shape: f32[1,128], index: 1, kind: input, shape index: {}]
  %s2 = inlined_call_operand.vmem [shape: f32[1,128], index: 2, kind: input, shape index: {}]
  %s3 = inlined_call_operand.vmem [shape: bf16[16,128], index: 3, kind: output, shape index: {}]
  %s4 = sld [smem:[#allocation0]]
  $region22: #{kb_wic_forward.11} parent=0
    _
  %s6 = ssub.s32 1, %s4
  %s7 = scalar_select 0, %s6, %s4
  // Predicated region
  $region2: #{kb_wic_forward.11} parent=0 // pred_check
    _
  $region3: #{kb_wic_forward.11} parent=0 // pred_check_branch
    %9 = sbr.rel (0) target = $region5
  $region4: #{kb_wic_forward.11} parent=0 // pred_region
    _
  $region5: #{kb_wic_forward.11} parent=0 // pred_fallthru
    _
  // Predicated region
  $region6: #{kb_wic_forward.11} parent=0 // pred_check
    _
  $region7: #{kb_wic_forward.11} parent=0 // pred_check_branch
    %11 = sbr.rel (0) target = $region9
  $region8: #{kb_wic_forward.11} parent=0 // pred_region
    _
  $region9: #{kb_wic_forward.11} parent=0 // pred_fallthru
    _
  // Predicated region
  $region10: #{kb_wic_forward.11} parent=0 // pred_check
    _
  $region11: #{kb_wic_forward.11} parent=0 // pred_check_branch
    %13 = sbr.rel (0) target = $region13
  $region12: #{kb_wic_forward.11} parent=0 // pred_region
    _
  $region13: #{kb_wic_forward.11} parent=0 // pred_fallthru
    _
  %v14 = vld [vmem:[%s0] sm:$0xf]
  %v15 = vld [vmem:[%s0 + $0x4] sm:$0xf]
  %v16 = vunpack.c.l.bf16 %v14
  %v17 = vunpack.c.l.bf16 %v15
  %18 = vadd.xlane.f32.xlu0 %v16
  %v19 = vpop.xlane.xlu0 %18
  %20 = vadd.xlane.f32.xlu0 %v17
  %v21 = vpop.xlane.xlu0 %20
  %v22 = vrcp.pop 128.0
  %v23 = vmul.f32 %v19, %v22
  %v24 = vmul.f32 %v21, %v22
  %v25 = vsub.f32 %v16, %v23
  %v26 = vsub.f32 %v17, %v24
  %v27 = vmul.f32 %v25, %v25
  %v28 = vmul.f32 %v26, %v26
  %29 = vadd.xlane.f32.xlu0 %v27
  %v30 = vpop.xlane.xlu0 %29
  %31 = vadd.xlane.f32.xlu0 %v28
  %v32 = vpop.xlane.xlu0 %31
  %v33 = vmul.f32 %v30, %v22
  %v34 = vmul.f32 %v32, %v22
  %v35 = vadd.f32 %v33, 1e-12
  %v36 = vadd.f32 %v34, 1e-12
  %v37 = vrsqrt.pop %v35
  %v38 = vrsqrt.pop %v36
  %v39 = vmul.f32 %v25, %v37
  %v40 = vmul.f32 %v26, %v38
  %v41 = vld [vmem:[%s1] sm:$0x1]
  %v43 = vlaneseq
  %v44 = vshrl.u32 %v43, 7
  %v45 = vsub.s32 0, %v44
  %v46 = vrot.slane %v41, %v45
  %v48 = vmul.f32 %v39, %v46
  %v49 = vmul.f32 %v40, %v46
  %v50 = vld [vmem:[%s2] sm:$0x1]
  %v52 = vlaneseq
  %v53 = vshrl.u32 %v52, 7
  %v54 = vsub.s32 0, %v53
  %v55 = vrot.slane %v50, %v54
  %v57 = vadd.f32 %v48, %v55
  %v58 = vadd.f32 %v49, %v55
  %v59 = vpack.c.bf16 %v58, %v57
  %v61 = vunpack.c.l.b16 %v59
  %v62 = vunpack.c.h.b16 %v59
  %v63 = vpack.c.b16 %v61, %v61
  %v64 = vpack.c.b16 %v62, %v62
  %67 = vst [vmem:[%s3] sm:$0xf] %v63
  %68 = vst [vmem:[%s3 + $0x4] sm:$0xf] %v64
  // Predicated region
  $region14: #{kb_wic_forward.11} parent=0 // pred_check
    _
  $region15: #{kb_wic_forward.11} parent=0 // pred_check_branch
    %70 = sbr.rel (0) target = $region17
  $region16: #{kb_wic_forward.11} parent=0 // pred_region
    _
  $region17: #{kb_wic_forward.11} parent=0 // pred_fallthru
    _
  // Predicated region
  $region18: #{kb_wic_forward.11} parent=0 // pred_check
    _
  $region19: #{kb_wic_forward.11} parent=0 // pred_check_branch
    %72 = sbr.rel (0) target = $region21
  $region20: #{kb_wic_forward.11} parent=0 // pred_region
    _
  $region21: #{kb_wic_forward.11} parent=0 // pred_fallthru
    _

// kernel: kb_wic_forward.14
$region0: #{kb_wic_forward.14}
  #allocation0 [shape = 'u32[]', space=smem, size = 0x4, offset = 0x4, fixed_abs, tag = 'smem constant byte address 0x4 - core index']
  #allocation1 [shape = 'u32[144,128]{1,0:T(1,128)}', space=vmem, size = 0x12000, scoped, tag = 'internal scratch']
  #allocation2 [shape = 'f32[16,128]{1,0:T(8,128)}', space=vmem, size = 0x2000, scoped, tag = 'scratch operand']
  %s0 = inlined_call_operand.vmem [shape: bf16[16,128], index: 0, kind: input, shape index: {}]
  %s1 = inlined_call_operand.vmem [shape: bf16[128,128], index: 1, kind: input, shape index: {}]
  %s2 = inlined_call_operand.vmem [shape: f32[1,128], index: 2, kind: input, shape index: {}]
  %s3 = inlined_call_operand.vmem [shape: bf16[16,128], index: 3, kind: input, shape index: {}]
  %s4 = inlined_call_operand.vmem [shape: f32[1,128], index: 4, kind: input, shape index: {}]
  %s5 = inlined_call_operand.vmem [shape: f32[1,128], index: 5, kind: input, shape index: {}]
  %s6 = inlined_call_operand.vmem [shape: bf16[16,128], index: 6, kind: output, shape index: {}]
  %s7 = sld [smem:[#allocation0]]
  $region42: #{kb_wic_forward.14} parent=0
    _
  %s9 = ssub.s32 1, %s7
  %s10 = scalar_select 0, %s9, %s7
  // Predicated region
  $region2: #{kb_wic_forward.14} parent=0 // pred_check
    _
  $region3: #{kb_wic_forward.14} parent=0 // pred_check_branch
    %12 = sbr.rel (0) target = $region5
  $region4: #{kb_wic_forward.14} parent=0 // pred_region
    _
  $region5: #{kb_wic_forward.14} parent=0 // pred_fallthru
    _
  // Predicated region
  $region6: #{kb_wic_forward.14} parent=0 // pred_check
    _
  $region7: #{kb_wic_forward.14} parent=0 // pred_check_branch
    %14 = sbr.rel (0) target = $region9
  $region8: #{kb_wic_forward.14} parent=0 // pred_region
    _
  $region9: #{kb_wic_forward.14} parent=0 // pred_fallthru
    _
  // Predicated region
  $region10: #{kb_wic_forward.14} parent=0 // pred_check
    _
  $region11: #{kb_wic_forward.14} parent=0 // pred_check_branch
    %16 = sbr.rel (0) target = $region13
  $region12: #{kb_wic_forward.14} parent=0 // pred_region
    _
  $region13: #{kb_wic_forward.14} parent=0 // pred_fallthru
    _
  // Predicated region
  $region14: #{kb_wic_forward.14} parent=0 // pred_check
    _
  $region15: #{kb_wic_forward.14} parent=0 // pred_check_branch
    %18 = sbr.rel (0) target = $region17
  $region16: #{kb_wic_forward.14} parent=0 // pred_region
    _
  $region17: #{kb_wic_forward.14} parent=0 // pred_fallthru
    _
  // Predicated region
  $region18: #{kb_wic_forward.14} parent=0 // pred_check
    _
  $region19: #{kb_wic_forward.14} parent=0 // pred_check_branch
    %20 = sbr.rel (0) target = $region21
  $region20: #{kb_wic_forward.14} parent=0 // pred_region
    _
  $region21: #{kb_wic_forward.14} parent=0 // pred_fallthru
    _
  // Predicated region
  $region22: #{kb_wic_forward.14} parent=0 // pred_check
    _
  $region23: #{kb_wic_forward.14} parent=0 // pred_check_branch
    %22 = sbr.rel (0) target = $region25
  $region24: #{kb_wic_forward.14} parent=0 // pred_region
    _
  $region25: #{kb_wic_forward.14} parent=0 // pred_fallthru
    _
  %p24 = scmp.eq.s32.totalorder 0, 0
  // Predicated region
  $region26: #{kb_wic_forward.14} parent=0 // pred_check
    %p25 = pneg %p24
  $region27: #{kb_wic_forward.14} parent=0 // pred_check_branch
    %27 = sbr.rel (%p25) target = $region29
  $region28: #{kb_wic_forward.14} parent=0 // pred_region
    %28 = vst [vmem:[#allocation2] sm:$0xff] 0.0
    %29 = vst [vmem:[#allocation2 + $0x8] sm:$0xff] 0.0
  $region29: #{kb_wic_forward.14} parent=0 // pred_fallthru
    _
  %v30 = vld [vmem:[#allocation2] sm:$0xff]
  %v31 = vld [vmem:[#allocation2 + $0x8] sm:$0xff]
  %v32 = vld [vmem:[%s0] sm:$0xf]
  %v33 = vld [vmem:[%s0 + $0x4] sm:$0xf]
  %v34 = vld [vmem:[%s1] sm:$0xf]
  %v35 = vld [vmem:[%s1 + $0x4] sm:$0xf]
  %v36 = vld [vmem:[%s1 + $0x8] sm:$0xf]
  %v37 = vld [vmem:[%s1 + $0xc] sm:$0xf]
  %v38 = vld [vmem:[%s1 + $0x10] sm:$0xf]
  %v39 = vld [vmem:[%s1 + $0x14] sm:$0xf]
  %v40 = vld [vmem:[%s1 + $0x18] sm:$0xf]
  %v41 = vld [vmem:[%s1 + $0x1c] sm:$0xf]
  %v42 = vld [vmem:[%s1 + $0x20] sm:$0xf]
  %v43 = vld [vmem:[%s1 + $0x24] sm:$0xf]
  %v44 = vld [vmem:[%s1 + $0x28] sm:$0xf]
  %v45 = vld [vmem:[%s1 + $0x2c] sm:$0xf]
  %v46 = vld [vmem:[%s1 + $0x30] sm:$0xf]
  %v47 = vld [vmem:[%s1 + $0x34] sm:$0xf]
  %v48 = vld [vmem:[%s1 + $0x38] sm:$0xf]
  %v49 = vld [vmem:[%s1 + $0x3c] sm:$0xf]
  %v52 = vunpack.c.l.b16 %v32
  %v53 = vunpack.c.l.b16 %v33
  %v54 = vpack.c.b16 %v53, %v52
  %v72 = vunpack.c.l.b16 %v34
  %v73 = vunpack.c.l.b16 %v35
  %v74 = vunpack.c.l.b16 %v36
  %v75 = vunpack.c.l.b16 %v37
  %v76 = vunpack.c.l.b16 %v38
  %v77 = vunpack.c.l.b16 %v39
  %v78 = vunpack.c.l.b16 %v40
  %v79 = vunpack.c.l.b16 %v41
  %v80 = vunpack.c.l.b16 %v42
  %v81 = vunpack.c.l.b16 %v43
  %v82 = vunpack.c.l.b16 %v44
  %v83 = vunpack.c.l.b16 %v45
  %v84 = vunpack.c.l.b16 %v46
  %v85 = vunpack.c.l.b16 %v47
  %v86 = vunpack.c.l.b16 %v48
  %v87 = vunpack.c.l.b16 %v49
  %v88 = vpack.c.b16 %v73, %v72
  %v89 = vpack.c.b16 %v75, %v74
  %v90 = vpack.c.b16 %v77, %v76
  %v91 = vpack.c.b16 %v79, %v78
  %v92 = vpack.c.b16 %v81, %v80
  %v93 = vpack.c.b16 %v83, %v82
  %v94 = vpack.c.b16 %v85, %v84
  %v95 = vpack.c.b16 %v87, %v86
  %104 = vmatprep.subr.bf16.mxu0 0
  %105 = vmatpush1.bf16.msra.mxu0 %v88
  %106 = vmatprep.subr.bf16.mxu0 0
  %107 = vmatpush1.bf16.msra.mxu0 %v89
  %108 = vmatprep.subr.bf16.mxu0 0
  %109 = vmatpush1.bf16.msra.mxu0 %v90
  %110 = vmatprep.subr.bf16.mxu0 0
  %111 = vmatpush1.bf16.msra.mxu0 %v91
  %112 = vmatprep.subr.bf16.mxu0 0
  %113 = vmatpush1.bf16.msra.mxu0 %v92
  %114 = vmatprep.subr.bf16.mxu0 0
  %115 = vmatpush1.bf16.msra.mxu0 %v93
  %116 = vmatprep.subr.bf16.mxu0 0
  %117 = vmatpush1.bf16.msra.mxu0 %v94
  %118 = vmatprep.subr.bf16.mxu0 0
  %119 = vmatpush1.bf16.msra.mxu0 %v95
  %120 = vmatprep.subr.bf16.mxu0 0
  %121 = vmatpush1.bf16.msra.mxu0 0
  %122 = vmatprep.subr.bf16.mxu0 0
  %123 = vmatpush1.bf16.msra.mxu0 0
  %124 = vmatprep.subr.bf16.mxu0 0
  %125 = vmatpush1.bf16.msra.mxu0 0
  %126 = vmatprep.subr.bf16.mxu0 0
  %127 = vmatpush1.bf16.msra.mxu0 0
  %128 = vmatprep.subr.bf16.mxu0 0
  %129 = vmatpush1.bf16.msra.mxu0 0
  %130 = vmatprep.subr.bf16.mxu0 0
  %131 = vmatpush1.bf16.msra.mxu0 0
  %132 = vmatprep.subr.bf16.mxu0 0
  %133 = vmatpush1.bf16.msra.mxu0 0
  %134 = vmatprep.subr.bf16.mxu0 0
  %135 = vmatpush1.bf16.msra.mxu0 0
  %136 = vmatprep.mubr.bf16.mxu0 0
  %137 = vmatmul.mubr.bf16.gmra.mrb[0].mxu0 %v54
  %v138 = vpop.f32.mrb[0].mxu0
  %v139 = vadd.f32 0.0, %v138
  %v140 = vpop.f32.mrb[0].mxu0
  %v141 = vpop.f32.mrb[0].mxu0
  %v142 = vadd.f32 0.0, %v141
  %v143 = vpop.f32.mrb[0].mxu0
  %144 = vdwg.mxu0
  %v145 = vadd.f32 %v30, %v139
  %v146 = vadd.f32 %v31, %v142
  %147 = vst [vmem:[#allocation2] sm:$0xff] %v145
  %148 = vst [vmem:[#allocation2 + $0x8] sm:$0xff] %v146
  // Predicated region
  $region30: #{kb_wic_forward.14} parent=0 // pred_check
    %p149 = pneg %p24
  $region31: #{kb_wic_forward.14} parent=0 // pred_check_branch
    %151 = sbr.rel (%p149) target = $region33
  $region32: #{kb_wic_forward.14} parent=0 // pred_region
    %v152 = vld [vmem:[#allocation2] sm:$0xff]
    %v153 = vld [vmem:[#allocation2 + $0x8] sm:$0xff]
    %v154 = vld [vmem:[%s2] sm:$0x1]
    %v156 = vlaneseq
    %v157 = vshrl.u32 %v156, 7
    %v158 = vsub.s32 0, %v157
    %v159 = vrot.slane %v154, %v158
    %v161 = vadd.f32 %v152, %v159
    %v162 = vadd.f32 %v153, %v159
    %v163 = vld [vmem:[%s3] sm:$0xf]
    %v164 = vld [vmem:[%s3 + $0x4] sm:$0xf]
    %v165 = vunpack.c.l.bf16 %v163
    %v166 = vunpack.c.l.bf16 %v164
    %v167 = vadd.f32 %v161, %v165
    %v168 = vadd.f32 %v162, %v166
    %169 = vadd.xlane.f32.xlu0 %v167
    %v170 = vpop.xlane.xlu0 %169
    %171 = vadd.xlane.f32.xlu0 %v168
    %v172 = vpop.xlane.xlu0 %171
    %v173 = vrcp.pop 128.0
    %v174 = vmul.f32 %v170, %v173
    %v175 = vmul.f32 %v172, %v173
    %v176 = vsub.f32 %v167, %v174
    %v177 = vsub.f32 %v168, %v175
    %v178 = vmul.f32 %v176, %v176
    %v179 = vmul.f32 %v177, %v177
    %180 = vadd.xlane.f32.xlu0 %v178
    %v181 = vpop.xlane.xlu0 %180
    %182 = vadd.xlane.f32.xlu0 %v179
    %v183 = vpop.xlane.xlu0 %182
    %v184 = vmul.f32 %v181, %v173
    %v185 = vmul.f32 %v183, %v173
    %v186 = vadd.f32 %v184, 1e-12
    %v187 = vadd.f32 %v185, 1e-12
    %v188 = vrsqrt.pop %v186
    %v189 = vrsqrt.pop %v187
    %v190 = vmul.f32 %v176, %v188
    %v191 = vmul.f32 %v177, %v189
    %v192 = vld [vmem:[%s4] sm:$0x1]
    %v194 = vlaneseq
    %v195 = vshrl.u32 %v194, 7
    %v196 = vsub.s32 0, %v195
    %v197 = vrot.slane %v192, %v196
    %v199 = vmul.f32 %v190, %v197
    %v200 = vmul.f32 %v191, %v197
    %v201 = vld [vmem:[%s5] sm:$0x1]
    %v203 = vlaneseq
    %v204 = vshrl.u32 %v203, 7
    %v205 = vsub.s32 0, %v204
    %v206 = vrot.slane %v201, %v205
    %v208 = vadd.f32 %v199, %v206
    %v209 = vadd.f32 %v200, %v206
    %v210 = vpack.c.bf16 %v209, %v208
    %v212 = vunpack.c.l.b16 %v210
    %v213 = vunpack.c.h.b16 %v210
    %v214 = vpack.c.b16 %v212, %v212
    %v215 = vpack.c.b16 %v213, %v213
    %218 = vst [vmem:[%s6] sm:$0xf] %v214
    %219 = vst [vmem:[%s6 + $0x4] sm:$0xf] %v215
  $region33: #{kb_wic_forward.14} parent=0 // pred_fallthru
    _
  // Predicated region
  $region34: #{kb_wic_forward.14} parent=0 // pred_check
    _
  $region35: #{kb_wic_forward.14} parent=0 // pred_check_branch
    %221 = sbr.rel (0) target = $region37
  $region36: #{kb_wic_forward.14} parent=0 // pred_region
    _
  $region37: #{kb_wic_forward.14} parent=0 // pred_fallthru
    _
  // Predicated region
  $region38: #{kb_wic_forward.14} parent=0 // pred_check
    _
  $region39: #{kb_wic_forward.14} parent=0 // pred_check_branch
    %223 = sbr.rel (0) target = $region41
  $region40: #{kb_wic_forward.14} parent=0 // pred_region
    _
  $region41: #{kb_wic_forward.14} parent=0 // pred_fallthru
    _

// kernel: kb_wic_forward.13
$region0: #{kb_wic_forward.13}
  #allocation0 [shape = 'u32[]', space=smem, size = 0x4, offset = 0x4, fixed_abs, tag = 'smem constant byte address 0x4 - core index']
  #allocation1 [shape = 'u32[144,128]{1,0:T(1,128)}', space=vmem, size = 0x12000, scoped, tag = 'internal scratch']
  %s0 = inlined_call_operand.vmem [shape: bf16[2,8,384], index: 0, kind: input, shape index: {}, may-alias: {0,1,2}]
  %s1 = inlined_call_operand.vmem [shape: bf16[2,8,384], index: 1, kind: input, shape index: {}, may-alias: {0,1,2}]
  %s2 = inlined_call_operand.vmem [shape: bf16[2,8,384], index: 2, kind: input, shape index: {}, may-alias: {0,1,2}]
  %s3 = inlined_call_operand.vmem [shape: f32[2,1,8], index: 3, kind: input, shape index: {}]
  %s4 = inlined_call_operand.vmem [shape: bf16[2,8,128], index: 4, kind: output, shape index: {}]
  %s5 = sld [smem:[#allocation0]]
  $region49: #{kb_wic_forward.13} parent=0
    _
  %s7 = ssub.s32 1, %s5
  %s8 = scalar_select 0, %s7, %s5
  loop: start=0, step=1, limit=4
  $region2: #{kb_wic_forward.13} parent=0 // loop_pre_header
    _
  $region3: #{kb_wic_forward.13} parent=0 // loop_header
    %s10 = sphi 0, %s14
    %p11 = scmp.ge.s32.totalorder %s10, 4
    %s17 = sphi 0, %s29
    %s18 = sphi 0, %s25
    %s19 = sphi 0, %s17
    %s20 = sphi 0, %s18
    %s21 = sphi 0, %s19
    %s22 = sphi 0, %s20
    %s34 = sphi 0, %s36
    %s37 = sphi 0, %s34
    %s38 = sphi 0, %s37
    %s54 = sphi 0, %s38
    %s64 = sphi 0, %s66
    %s67 = sphi 0, %s64
    %s68 = sphi 0, %s67
    %s84 = sphi 0, %s68
    %s94 = sphi 0, %s96
    %s97 = sphi 0, %s94
    %s98 = sphi 0, %s97
    %s114 = sphi 0, %s98
    %s120 = sphi 0, %s122
    %s123 = sphi 0, %s120
    %s124 = sphi 0, %s123
    %s140 = sphi 0, %s124
    %s148 = sphi 0, %s150
    %s151 = sphi 0, %s148
    %s152 = sphi 0, %s151
    %s168 = sphi 0, %s152
  $region4: #{kb_wic_forward.13} parent=0 // loop_header_branch
    %13 = sbr.rel (%p11) target = $region8
  $region5: #{kb_wic_forward.13} parent=0 // loop_body
    %s15 = ssub.s32 %s10, 1
    %s16 = ssub.s32 %s10, 2
    %s23 = sadd.s32 1, %s18
    %p24 = scmp.ge.s32.totalorder %s23, 1
    %s25 = scalar_select %p24, 0, %s23
    %s26 = sadd.s32 1, %s17
    %s27 = scalar_select %p24, %s26, %s17
    %p28 = scmp.ge.s32.totalorder %s27, 2
    %s29 = scalar_select %p28, 0, %s27
    %s30 = ssub.s32 %s17, %s29
    %s31 = ssub.s32 %s18, %s25
    %s32 = sor.u32 %s30, %s31
    %p33 = scmp.eq.s32.totalorder %s32, 0
    %s35 = sadd.s32 %s34, 1
    %s36 = scalar_select %p33, %s34, %s35
    %p39 = pneg %p33
    %p40 = scmp.eq.s32.totalorder %s10, 1
    %p41 = por %p39, %p40
    %p42 = scmp.ne.s32.totalorder %s34, %s37
    %p43 = scmp.eq.s32.totalorder %s10, 0
    %p44 = por %p42, %p43
    %p45 = scmp.ne.s32.totalorder %s34, %s37
    %p46 = scmp.eq.s32.totalorder %s15, 1
    %p47 = por %p45, %p46
    %p48 = scmp.ne.s32.totalorder %s37, %s38
    %p49 = scmp.eq.s32.totalorder %s15, 0
    %p50 = por %p48, %p49
    %p51 = scmp.ne.s32.totalorder %s37, %s38
    %p52 = scmp.eq.s32.totalorder %s16, 1
    %p53 = por %p51, %p52
    %p55 = scmp.ne.s32.totalorder %s38, %s54
    %p56 = scmp.eq.s32.totalorder %s16, 0
    %p57 = por %p55, %p56
    %s58 = sadd.s32 %s18, 1
    %s59 = sadd.s32 %s25, 1
    %s60 = ssub.s32 %s17, %s29
    %s61 = ssub.s32 %s58, %s59
    %s62 = sor.u32 %s60, %s61
    %p63 = scmp.eq.s32.totalorder %s62, 0
    %s65 = sadd.s32 %s64, 1
    %s66 = scalar_select %p63, %s64, %s65
    %p69 = pneg %p63
    %p70 = scmp.eq.s32.totalorder %s10, 1
    %p71 = por %p69, %p70
    %p72 = scmp.ne.s32.totalorder %s64, %s67
    %p73 = scmp.eq.s32.totalorder %s10, 0
    %p74 = por %p72, %p73
    %p75 = scmp.ne.s32.totalorder %s64, %s67
    %p76 = scmp.eq.s32.totalorder %s15, 1
    %p77 = por %p75, %p76
    %p78 = scmp.ne.s32.totalorder %s67, %s68
    %p79 = scmp.eq.s32.totalorder %s15, 0
    %p80 = por %p78, %p79
    %p81 = scmp.ne.s32.totalorder %s67, %s68
    %p82 = scmp.eq.s32.totalorder %s16, 1
    %p83 = por %p81, %p82
    %p85 = scmp.ne.s32.totalorder %s68, %s84
    %p86 = scmp.eq.s32.totalorder %s16, 0
    %p87 = por %p85, %p86
    %s88 = sadd.s32 %s18, 2
    %s89 = sadd.s32 %s25, 2
    %s90 = ssub.s32 %s17, %s29
    %s91 = ssub.s32 %s88, %s89
    %s92 = sor.u32 %s90, %s91
    %p93 = scmp.eq.s32.totalorder %s92, 0
    %s95 = sadd.s32 %s94, 1
    %s96 = scalar_select %p93, %s94, %s95
    %p99 = pneg %p93
    %p100 = scmp.eq.s32.totalorder %s10, 1
    %p101 = por %p99, %p100
    %p102 = scmp.ne.s32.totalorder %s94, %s97
    %p103 = scmp.eq.s32.totalorder %s10, 0
    %p104 = por %p102, %p103
    %p105 = scmp.ne.s32.totalorder %s94, %s97
    %p106 = scmp.eq.s32.totalorder %s15, 1
    %p107 = por %p105, %p106
    %p108 = scmp.ne.s32.totalorder %s97, %s98
    %p109 = scmp.eq.s32.totalorder %s15, 0
    %p110 = por %p108, %p109
    %p111 = scmp.ne.s32.totalorder %s97, %s98
    %p112 = scmp.eq.s32.totalorder %s16, 1
    %p113 = por %p111, %p112
    %p115 = scmp.ne.s32.totalorder %s98, %s114
    %p116 = scmp.eq.s32.totalorder %s16, 0
    %p117 = por %p115, %p116
    %s118 = ssub.s32 %s17, %s29
    %p119 = scmp.eq.s32.totalorder %s118, 0
    %s121 = sadd.s32 %s120, 1
    %s122 = scalar_select %p119, %s120, %s121
    %p125 = pneg %p119
    %p126 = scmp.eq.s32.totalorder %s10, 1
    %p127 = por %p125, %p126
    %p128 = scmp.ne.s32.totalorder %s120, %s123
    %p129 = scmp.eq.s32.totalorder %s10, 0
    %p130 = por %p128, %p129
    %p131 = scmp.ne.s32.totalorder %s120, %s123
    %p132 = scmp.eq.s32.totalorder %s15, 1
    %p133 = por %p131, %p132
    %p134 = scmp.ne.s32.totalorder %s123, %s124
    %p135 = scmp.eq.s32.totalorder %s15, 0
    %p136 = por %p134, %p135
    %p137 = scmp.ne.s32.totalorder %s123, %s124
    %p138 = scmp.eq.s32.totalorder %s16, 1
    %p139 = por %p137, %p138
    %p141 = scmp.ne.s32.totalorder %s124, %s140
    %p142 = scmp.eq.s32.totalorder %s16, 0
    %p143 = por %p141, %p142
    %s144 = ssub.s32 %s17, %s29
    %s145 = ssub.s32 %s18, %s25
    %s146 = sor.u32 %s144, %s145
    %p147 = scmp.eq.s32.totalorder %s146, 0
    %s149 = sadd.s32 %s148, 1
    %s150 = scalar_select %p147, %s148, %s149
    %p153 = pneg %p147
    %p154 = scmp.eq.s32.totalorder %s10, 1
    %p155 = por %p153, %p154
    %p156 = scmp.ne.s32.totalorder %s148, %s151
    %p157 = scmp.eq.s32.totalorder %s10, 0
    %p158 = por %p156, %p157
    %p159 = scmp.ne.s32.totalorder %s148, %s151
    %p160 = scmp.eq.s32.totalorder %s15, 1
    %p161 = por %p159, %p160
    %p162 = scmp.ne.s32.totalorder %s151, %s152
    %p163 = scmp.eq.s32.totalorder %s15, 0
    %p164 = por %p162, %p163
    %p165 = scmp.ne.s32.totalorder %s151, %s152
    %p166 = scmp.eq.s32.totalorder %s16, 1
    %p167 = por %p165, %p166
    %p169 = scmp.ne.s32.totalorder %s152, %s168
    %p170 = scmp.eq.s32.totalorder %s16, 0
    %p171 = por %p169, %p170
    %p172 = scmp.le.s32.totalorder 1, %s10
    %p173 = scmp.lt.s32.totalorder %s10, 3
    %p174 = pnand %p172, %p173
    %p175 = pneg %p174
    // Predicated region
    $region9: #{kb_wic_forward.13} parent=5 // pred_check
      _
    $region10: #{kb_wic_forward.13} parent=5 // pred_check_branch
      %177 = sbr.rel (%p174) target = $region12
    $region11: #{kb_wic_forward.13} parent=5 // pred_region
      %s178 = ssub.s32 %s10, 1
    $region12: #{kb_wic_forward.13} parent=5 // pred_fallthru
      _
    %p179 = scmp.lt.s32.totalorder %s10, 2
    // Predicated region
    $region13: #{kb_wic_forward.13} parent=5 // pred_check
      %p180 = pneg %p179
    $region14: #{kb_wic_forward.13} parent=5 // pred_check_branch
      %182 = sbr.rel (%p180) target = $region16
    $region15: #{kb_wic_forward.13} parent=5 // pred_region
      // Predicated region
      $region17: #{kb_wic_forward.13} parent=15 // pred_check
        %p183 = pneg %p44
      $region18: #{kb_wic_forward.13} parent=15 // pred_check_branch
        %185 = sbr.rel (%p183) target = $region20
      $region19: #{kb_wic_forward.13} parent=15 // pred_region
        %p186 = scmp.lt.s32.totalorder %s17, 1
        %s187 = scalar_select %p186, %s17, 1
        %p188 = scmp.lt.s32.totalorder %s18, 2
        %s189 = scalar_select %p188, %s18, 2
        %s190 = smul.addr %s187, 3
        %s191 = sadd.s32 %s189, %s190
        %s192 = smul.addr %s191, 4
        %s193 = scalar_lea.vmem %s0, %s192
      $region20: #{kb_wic_forward.13} parent=15 // pred_fallthru
        _
      // Predicated region
      $region21: #{kb_wic_forward.13} parent=15 // pred_check
        %p194 = pneg %p74
      $region22: #{kb_wic_forward.13} parent=15 // pred_check_branch
        %196 = sbr.rel (%p194) target = $region24
      $region23: #{kb_wic_forward.13} parent=15 // pred_region
        %s197 = sadd.s32 %s18, 1
        %p198 = scmp.lt.s32.totalorder %s17, 1
        %s199 = scalar_select %p198, %s17, 1
        %p200 = scmp.lt.s32.totalorder %s197, 2
        %s201 = scalar_select %p200, %s197, 2
        %s202 = smul.addr %s199, 3
        %s203 = sadd.s32 %s201, %s202
        %s204 = smul.addr %s203, 4
        %s205 = scalar_lea.vmem %s1, %s204
        %s206 = sadd.s32 %s18, 1
      $region24: #{kb_wic_forward.13} parent=15 // pred_fallthru
        _
      // Predicated region
      $region25: #{kb_wic_forward.13} parent=15 // pred_check
        %p207 = pneg %p104
      $region26: #{kb_wic_forward.13} parent=15 // pred_check_branch
        %209 = sbr.rel (%p207) target = $region28
      $region27: #{kb_wic_forward.13} parent=15 // pred_region
        %s210 = sadd.s32 %s18, 2
        %p211 = scmp.lt.s32.totalorder %s17, 1
        %s212 = scalar_select %p211, %s17, 1
        %p213 = scmp.lt.s32.totalorder %s210, 2
        %s214 = scalar_select %p213, %s210, 2
        %s215 = smul.addr %s212, 3
        %s216 = sadd.s32 %s214, %s215
        %s217 = smul.addr %s216, 4
        %s218 = scalar_lea.vmem %s2, %s217
        %s219 = sadd.s32 %s18, 2
      $region28: #{kb_wic_forward.13} parent=15 // pred_fallthru
        _
      // Predicated region
      $region29: #{kb_wic_forward.13} parent=15 // pred_check
        %p220 = pneg %p130
      $region30: #{kb_wic_forward.13} parent=15 // pred_check_branch
        %222 = sbr.rel (%p220) target = $region32
      $region31: #{kb_wic_forward.13} parent=15 // pred_region
        %p223 = scmp.lt.s32.totalorder %s17, 1
        %s224 = scalar_select %p223, %s17, 1
        %s225 = scalar_lea.vmem %s3, %s224
      $region32: #{kb_wic_forward.13} parent=15 // pred_fallthru
        _
    $region16: #{kb_wic_forward.13} parent=5 // pred_fallthru
      _
    %p226 = scmp.le.s32.totalorder 1, %s10
    %p227 = scmp.lt.s32.totalorder %s10, 3
    %p228 = pnand %p226, %p227
    %p229 = pneg %p228
    // Predicated region
    $region33: #{kb_wic_forward.13} parent=5 // pred_check
      _
    $region34: #{kb_wic_forward.13} parent=5 // pred_check_branch
      %231 = sbr.rel (%p228) target = $region36
    $region35: #{kb_wic_forward.13} parent=5 // pred_region
      %s232 = ssub.s32 %s10, 1
      %p233 = scmp.lt.s32.totalorder %s19, 1
      %s234 = scalar_select %p233, %s19, 1
      %p235 = scmp.lt.s32.totalorder %s20, 2
      %s236 = scalar_select %p235, %s20, 2
      %s237 = smul.addr %s234, 3
      %s238 = sadd.s32 %s236, %s237
      %s239 = smul.addr %s238, 4
      %s240 = scalar_lea.vmem %s0, %s239
      %p241 = pneg %p50
      %p242 = pneg %p47
      %s243 = sadd.s32 %s20, 1
      %p244 = scmp.lt.s32.totalorder %s19, 1
      %s245 = scalar_select %p244, %s19, 1
      %p246 = scmp.lt.s32.totalorder %s243, 2
      %s247 = scalar_select %p246, %s243, 2
      %s248 = smul.addr %s245, 3
      %s249 = sadd.s32 %s247, %s248
      %s250 = smul.addr %s249, 4
      %s251 = scalar_lea.vmem %s1, %s250
      %p252 = pneg %p80
      %p253 = pneg %p77
      %s254 = sadd.s32 %s20, 2
      %p255 = scmp.lt.s32.totalorder %s19, 1
      %s256 = scalar_select %p255, %s19, 1
      %p257 = scmp.lt.s32.totalorder %s254, 2
      %s258 = scalar_select %p257, %s254, 2
      %s259 = smul.addr %s256, 3
      %s260 = sadd.s32 %s258, %s259
      %s261 = smul.addr %s260, 4
      %s262 = scalar_lea.vmem %s2, %s261
      %p263 = pneg %p110
      %p264 = pneg %p107
      %p265 = scmp.lt.s32.totalorder %s19, 1
      %s266 = scalar_select %p265, %s19, 1
      %s267 = scalar_lea.vmem %s3, %s266
      %p268 = pneg %p136
      %p269 = pneg %p133
      %p270 = pneg %p164
      %p271 = pneg %p161
      %p272 = scmp.lt.s32.totalorder %s19, 1
      %s273 = scalar_select %p272, %s19, 1
      %p274 = scmp.lt.s32.totalorder %s20, 0
      %s275 = scalar_select %p274, %s20, 0
      %s276 = sadd.s32 %s275, %s273
      %s277 = smul.addr %s276, 4
      %s278 = scalar_lea.vmem %s4, %s277
      %p279 = scmp.lt.s32.totalorder %s19, 1
      %s280 = scalar_select %p279, %s19, 1
      %p281 = scmp.lt.s32.totalorder %s20, 2
      %s282 = scalar_select %p281, %s20, 2
      %s283 = smul.addr %s280, 3
      %s284 = sadd.s32 %s282, %s283
      %s285 = smul.addr %s284, 4
      %s286 = scalar_lea.vmem %s0, %s285
      %s287 = sadd.s32 %s20, 1
      %p288 = scmp.lt.s32.totalorder %s19, 1
      %s289 = scalar_select %p288, %s19, 1
      %p290 = scmp.lt.s32.totalorder %s287, 2
      %s291 = scalar_select %p290, %s287, 2
      %s292 = smul.addr %s289, 3
      %s293 = sadd.s32 %s291, %s292
      %s294 = smul.addr %s293, 4
      %s295 = scalar_lea.vmem %s1, %s294
      %s296 = sadd.s32 %s20, 1
      %s297 = sadd.s32 %s20, 2
      %p298 = scmp.lt.s32.totalorder %s19, 1
      %s299 = scalar_select %p298, %s19, 1
      %p300 = scmp.lt.s32.totalorder %s297, 2
      %s301 = scalar_select %p300, %s297, 2
      %s302 = smul.addr %s299, 3
      %s303 = sadd.s32 %s301, %s302
      %s304 = smul.addr %s303, 4
      %s305 = scalar_lea.vmem %s2, %s304
      %s306 = sadd.s32 %s20, 2
      %p307 = scmp.lt.s32.totalorder %s19, 1
      %s308 = scalar_select %p307, %s19, 1
      %s309 = scalar_lea.vmem %s3, %s308
      %p310 = scmp.lt.s32.totalorder %s19, 1
      %s311 = scalar_select %p310, %s19, 1
      %p312 = scmp.lt.s32.totalorder %s20, 0
      %s313 = scalar_select %p312, %s20, 0
      %s314 = sadd.s32 %s313, %s311
      %s315 = smul.addr %s314, 4
      %s316 = scalar_lea.vmem %s4, %s315
      %v319 = vld [vmem:[%s286] sm:$0xf]
      %v320 = vmul.bf16 %v319, 1040203264
      %v321 = vld [vmem:[%s295] sm:$0xf]
      %v322 = vld [vmem:[%s305] sm:$0xf]
      %v323 = vld [vmem:[%s309] sm:$0x1]
      %v325 = vlaneseq
      %v326 = vshrl.u32 %v325, 7
      %v327 = vsub.s32 0, %v326
      %v328 = vrot.slane %v323, %v327
      %vm330 = vcmask 523264
      %v332 = vsel %vm330, %v320, 0
      %v335 = vsel %vm330, %v321, 0
      %337 = vmatprep.subr.bf16.mxu0 0
      %338 = vmatpush1.bf16.xpose.msra.mxu0 %v335
      %339 = vmatprep.subr.bf16.mxu0 0
      %340 = vmatpush1.bf16.xpose.msra.mxu0 0
      %341 = vmatprep.subr.bf16.mxu0 0
      %342 = vmatpush1.bf16.xpose.msra.mxu0 0
      %343 = vmatprep.subr.bf16.mxu0 0
      %344 = vmatpush1.bf16.xpose.msra.mxu0 0
      %345 = vmatprep.subr.bf16.mxu0 0
      %346 = vmatpush1.bf16.xpose.msra.mxu0 0
      %347 = vmatprep.subr.bf16.mxu0 0
      %348 = vmatpush1.bf16.xpose.msra.mxu0 0
      %349 = vmatprep.subr.bf16.mxu0 0
      %350 = vmatpush1.bf16.xpose.msra.mxu0 0
      %351 = vmatprep.subr.bf16.mxu0 0
      %352 = vmatpush1.bf16.xpose.msra.mxu0 0
      %353 = vmatprep.subr.bf16.mxu0 0
      %354 = vmatpush1.bf16.xpose.msra.mxu0 0
      %355 = vmatprep.subr.bf16.mxu0 0
      %356 = vmatpush1.bf16.xpose.msra.mxu0 0
      %357 = vmatprep.subr.bf16.mxu0 0
      %358 = vmatpush1.bf16.xpose.msra.mxu0 0
      %359 = vmatprep.subr.bf16.mxu0 0
      %360 = vmatpush1.bf16.xpose.msra.mxu0 0
      %361 = vmatprep.subr.bf16.mxu0 0
      %362 = vmatpush1.bf16.xpose.msra.mxu0 0
      %363 = vmatprep.subr.bf16.mxu0 0
      %364 = vmatpush1.bf16.xpose.msra.mxu0 0
      %365 = vmatprep.subr.bf16.mxu0 0
      %366 = vmatpush1.bf16.xpose.msra.mxu0 0
      %367 = vmatprep.subr.bf16.mxu0 0
      %368 = vmatpush1.bf16.xpose.msra.mxu0 0
      %369 = vmatprep.mubr.bf16.mxu0 0
      %370 = vmatmul.mubr.bf16.gmra.mrb[0].mxu0 %v332
      %v371 = vpop.f32.mrb[0].mxu0
      %v372 = vadd.f32 %v328, %v371
      %v373 = vpop.f32.mrb[0].mxu0
      %v374 = vpop.f32.mrb[0].mxu0
      %v375 = vpop.f32.mrb[0].mxu0
      %376 = vdwg.mxu0
      %vm377 = vcmask 64512
      %v378 = vsel %vm377, %v372, -inf
      %379 = vmax.xlane.f32.xlu0 %v378
      %v380 = vpop.xlane.xlu0 %379
      %v381 = vsub.f32 %v372, %v380
      %v382 = vmul.f32 %v381, 1.442695
      %v383 = vpow.pop %v382
      %v384 = vsel %vm377, %v383, 0.0
      %385 = vadd.xlane.f32.xlu0 %v384
      %v386 = vpop.xlane.xlu0 %385
      %v387 = vrcp.pop %v386
      %v388 = vmul.f32 %v383, %v387
      %v389 = vpack.c.bf16 %v388, %v388
      %v391 = vsel %vm377, %v389, 0
      %vm393 = vcmask 1043456
      %v395 = vsel %vm393, %v322, 0
      %397 = vmatprep.subr.bf16.mxu0 0
      %398 = vmatpush1.bf16.msra.mxu0 %v395
      %399 = vmatprep.subr.bf16.mxu0 0
      %400 = vmatpush1.bf16.msra.mxu0 0
      %401 = vmatprep.subr.bf16.mxu0 0
      %402 = vmatpush1.bf16.msra.mxu0 0
      %403 = vmatprep.subr.bf16.mxu0 0
      %404 = vmatpush1.bf16.msra.mxu0 0
      %405 = vmatprep.subr.bf16.mxu0 0
      %406 = vmatpush1.bf16.msra.mxu0 0
      %407 = vmatprep.subr.bf16.mxu0 0
      %408 = vmatpush1.bf16.msra.mxu0 0
      %409 = vmatprep.subr.bf16.mxu0 0
      %410 = vmatpush1.bf16.msra.mxu0 0
      %411 = vmatprep.subr.bf16.mxu0 0
      %412 = vmatpush1.bf16.msra.mxu0 0
      %413 = vmatprep.subr.bf16.mxu0 0
      %414 = vmatpush1.bf16.msra.mxu0 0
      %415 = vmatprep.subr.bf16.mxu0 0
      %416 = vmatpush1.bf16.msra.mxu0 0
      %417 = vmatprep.subr.bf16.mxu0 0
      %418 = vmatpush1.bf16.msra.mxu0 0
      %419 = vmatprep.subr.bf16.mxu0 0
      %420 = vmatpush1.bf16.msra.mxu0 0
      %421 = vmatprep.subr.bf16.mxu0 0
      %422 = vmatpush1.bf16.msra.mxu0 0
      %423 = vmatprep.subr.bf16.mxu0 0
      %424 = vmatpush1.bf16.msra.mxu0 0
      %425 = vmatprep.subr.bf16.mxu0 0
      %426 = vmatpush1.bf16.msra.mxu0 0
      %427 = vmatprep.subr.bf16.mxu0 0
      %428 = vmatpush1.bf16.msra.mxu0 0
      %429 = vmatprep.mubr.bf16.mxu0 0
      %430 = vmatmul.mubr.bf16.gmra.mrb[0].mxu0 %v391
      %v431 = vpop.f32.mrb[0].mxu0
      %v432 = vadd.f32 0.0, %v431
      %v433 = vpop.f32.mrb[0].mxu0
      %v434 = vpop.f32.mrb[0].mxu0
      %v435 = vpop.f32.mrb[0].mxu0
      %436 = vdwg.mxu0
      %v438 = vunpack.c.l.b16 %v320
      %v439 = vpack.c.b16 %v438, %v438
      %440 = vrot.lane.b32.xlu0 %v439, 64
      %v441 = vpop.permute.xlu0 %440
      %v443 = vunpack.c.l.b16 %v321
      %v444 = vpack.c.b16 %v443, %v443
      %445 = vrot.lane.b32.xlu0 %v444, 64
      %v446 = vpop.permute.xlu0 %445
      %v448 = vsel %vm330, %v441, 0
      %v451 = vsel %vm330, %v446, 0
      %453 = vmatprep.subr.bf16.mxu0 0
      %454 = vmatpush1.bf16.xpose.msra.mxu0 %v451
      %455 = vmatprep.subr.bf16.mxu0 0
      %456 = vmatpush1.bf16.xpose.msra.mxu0 0
      %457 = vmatprep.subr.bf16.mxu0 0
      %458 = vmatpush1.bf16.xpose.msra.mxu0 0
      %459 = vmatprep.subr.bf16.mxu0 0
      %460 = vmatpush1.bf16.xpose.msra.mxu0 0
      %461 = vmatprep.subr.bf16.mxu0 0
      %462 = vmatpush1.bf16.xpose.msra.mxu0 0
      %463 = vmatprep.subr.bf16.mxu0 0
      %464 = vmatpush1.bf16.xpose.msra.mxu0 0
      %465 = vmatprep.subr.bf16.mxu0 0
      %466 = vmatpush1.bf16.xpose.msra.mxu0 0
      %467 = vmatprep.subr.bf16.mxu0 0
      %468 = vmatpush1.bf16.xpose.msra.mxu0 0
      %469 = vmatprep.subr.bf16.mxu0 0
      %470 = vmatpush1.bf16.xpose.msra.mxu0 0
      %471 = vmatprep.subr.bf16.mxu0 0
      %472 = vmatpush1.bf16.xpose.msra.mxu0 0
      %473 = vmatprep.subr.bf16.mxu0 0
      %474 = vmatpush1.bf16.xpose.msra.mxu0 0
      %475 = vmatprep.subr.bf16.mxu0 0
      %476 = vmatpush1.bf16.xpose.msra.mxu0 0
      %477 = vmatprep.subr.bf16.mxu0 0
      %478 = vmatpush1.bf16.xpose.msra.mxu0 0
      %479 = vmatprep.subr.bf16.mxu0 0
      %480 = vmatpush1.bf16.xpose.msra.mxu0 0
      %481 = vmatprep.subr.bf16.mxu0 0
      %482 = vmatpush1.bf16.xpose.msra.mxu0 0
      %483 = vmatprep.subr.bf16.mxu0 0
      %484 = vmatpush1.bf16.xpose.msra.mxu0 0
      %485 = vmatprep.mubr.bf16.mxu0 0
      %486 = vmatmul.mubr.bf16.gmra.mrb[0].mxu0 %v448
      %v487 = vpop.f32.mrb[0].mxu0
      %v488 = vadd.f32 %v328, %v487
      %v489 = vpop.f32.mrb[0].mxu0
      %v490 = vpop.f32.mrb[0].mxu0
      %v491 = vpop.f32.mrb[0].mxu0
      %492 = vdwg.mxu0
      %v493 = vsel %vm377, %v488, -inf
      %494 = vmax.xlane.f32.xlu0 %v493
      %v495 = vpop.xlane.xlu0 %494
      %v496 = vsub.f32 %v488, %v495
      %v497 = vmul.f32 %v496, 1.442695
      %v498 = vpow.pop %v497
      %v499 = vsel %vm377, %v498, 0.0
      %500 = vadd.xlane.f32.xlu0 %v499
      %v501 = vpop.xlane.xlu0 %500
      %v502 = vrcp.pop %v501
      %v503 = vmul.f32 %v498, %v502
      %v504 = vpack.c.bf16 %v503, %v503
      %v506 = vunpack.c.l.b16 %v322
      %v507 = vpack.c.b16 %v506, %v506
      %508 = vrot.lane.b32.xlu0 %v507, 64
      %v509 = vpop.permute.xlu0 %508
      %v511 = vsel %vm377, %v504, 0
      %v514 = vsel %vm393, %v509, 0
      %516 = vmatprep.subr.bf16.mxu0 0
      %517 = vmatpush1.bf16.msra.mxu0 %v514
      %518 = vmatprep.subr.bf16.mxu0 0
      %519 = vmatpush1.bf16.msra.mxu0 0
      %520 = vmatprep.subr.bf16.mxu0 0
      %521 = vmatpush1.bf16.msra.mxu0 0
      %522 = vmatprep.subr.bf16.mxu0 0
      %523 = vmatpush1.bf16.msra.mxu0 0
      %524 = vmatprep.subr.bf16.mxu0 0
      %525 = vmatpush1.bf16.msra.mxu0 0
      %526 = vmatprep.subr.bf16.mxu0 0
      %527 = vmatpush1.bf16.msra.mxu0 0
      %528 = vmatprep.subr.bf16.mxu0 0
      %529 = vmatpush1.bf16.msra.mxu0 0
      %530 = vmatprep.subr.bf16.mxu0 0
      %531 = vmatpush1.bf16.msra.mxu0 0
      %532 = vmatprep.subr.bf16.mxu0 0
      %533 = vmatpush1.bf16.msra.mxu0 0
      %534 = vmatprep.subr.bf16.mxu0 0
      %535 = vmatpush1.bf16.msra.mxu0 0
      %536 = vmatprep.subr.bf16.mxu0 0
      %537 = vmatpush1.bf16.msra.mxu0 0
      %538 = vmatprep.subr.bf16.mxu0 0
      %539 = vmatpush1.bf16.msra.mxu0 0
      %540 = vmatprep.subr.bf16.mxu0 0
      %541 = vmatpush1.bf16.msra.mxu0 0
      %542 = vmatprep.subr.bf16.mxu0 0
      %543 = vmatpush1.bf16.msra.mxu0 0
      %544 = vmatprep.subr.bf16.mxu0 0
      %545 = vmatpush1.bf16.msra.mxu0 0
      %546 = vmatprep.subr.bf16.mxu0 0
      %547 = vmatpush1.bf16.msra.mxu0 0
      %548 = vmatprep.mubr.bf16.mxu0 0
      %549 = vmatmul.mubr.bf16.gmra.mrb[0].mxu0 %v511
      %v550 = vpop.f32.mrb[0].mxu0
      %v551 = vadd.f32 0.0, %v550
      %v552 = vpop.f32.mrb[0].mxu0
      %v553 = vpop.f32.mrb[0].mxu0
      %v554 = vpop.f32.mrb[0].mxu0
      %555 = vdwg.mxu0
      %557 = vrot.lane.b32.xlu0 %v551, 64
      %v558 = vpop.permute.xlu0 %557
      %v560 = vsel %vm330, %v432, %v558
      %v561 = vpack.c.bf16 %v560, %v560
      %562 = vst [vmem:[%s316] sm:$0xf] %v561
      %p563 = scmp.lt.s32.totalorder %s19, 1
      %s564 = scalar_select %p563, %s19, 1
      %p565 = scmp.lt.s32.totalorder %s20, 0
      %s566 = scalar_select %p565, %s20, 0
      %s567 = sadd.s32 %s566, %s564
      %s568 = smul.addr %s567, 4
      %s569 = scalar_lea.vmem %s4, %s568
      // Predicated region
      $region37: #{kb_wic_forward.13} parent=35 // pred_check
        %p570 = pneg %p161
      $region38: #{kb_wic_forward.13} parent=35 // pred_check_branch
        %572 = sbr.rel (%p570) target = $region40
      $region39: #{kb_wic_forward.13} parent=35 // pred_region
        _
      $region40: #{kb_wic_forward.13} parent=35 // pred_fallthru
        _
    $region36: #{kb_wic_forward.13} parent=5 // pred_fallthru
      _
    %p573 = scmp.le.s32.totalorder 2, %s10
    // Predicated region
    $region41: #{kb_wic_forward.13} parent=5 // pred_check
      %p574 = pneg %p573
    $region42: #{kb_wic_forward.13} parent=5 // pred_check_branch
      %576 = sbr.rel (%p574) target = $region44
    $region43: #{kb_wic_forward.13} parent=5 // pred_region
      %s577 = ssub.s32 %s10, 2
      // Predicated region
      $region45: #{kb_wic_forward.13} parent=43 // pred_check
        %p578 = pneg %p167
      $region46: #{kb_wic_forward.13} parent=43 // pred_check_branch
        %580 = sbr.rel (%p578) target = $region48
      $region47: #{kb_wic_forward.13} parent=43 // pred_region
        %p581 = scmp.lt.s32.totalorder %s21, 1
        %s582 = scalar_select %p581, %s21, 1
        %p583 = scmp.lt.s32.totalorder %s22, 0
        %s584 = scalar_select %p583, %s22, 0
        %s585 = sadd.s32 %s584, %s582
        %s586 = smul.addr %s585, 4
        %s587 = scalar_lea.vmem %s4, %s586
      $region48: #{kb_wic_forward.13} parent=43 // pred_fallthru
        _
    $region44: #{kb_wic_forward.13} parent=5 // pred_fallthru
      _
  $region6: #{kb_wic_forward.13} parent=0 // loop_footer
    %s14 = sadd.s32 1, %s10
  $region7: #{kb_wic_forward.13} parent=0 // loop_footer_branch
    %9 = sbr.rel target = $region3
  $region8: #{kb_wic_forward.13} parent=0 // loop_exit
    _

// kernel: kb_wic_forward.12
$region0: #{kb_wic_forward.12}
  #allocation0 [shape = 'u32[]', space=smem, size = 0x4, offset = 0x4, fixed_abs, tag = 'smem constant byte address 0x4 - core index']
  #allocation1 [shape = 'u32[144,128]{1,0:T(1,128)}', space=vmem, size = 0x12000, scoped, tag = 'internal scratch']
  #allocation2 [shape = 'f32[16,384]{1,0:T(8,128)}', space=vmem, size = 0x6000, scoped, tag = 'scratch operand']
  %s0 = inlined_call_operand.vmem [shape: bf16[16,128], index: 0, kind: input, shape index: {}]
  %s1 = inlined_call_operand.vmem [shape: bf16[128,384], index: 1, kind: input, shape index: {}]
  %s2 = inlined_call_operand.vmem [shape: f32[1,384], index: 2, kind: input, shape index: {}]
  %s3 = inlined_call_operand.vmem [shape: bf16[16,384], index: 3, kind: output, shape index: {}]
  %s4 = sld [smem:[#allocation0]]
  $region30: #{kb_wic_forward.12} parent=0
    _
  %s6 = ssub.s32 1, %s4
  %s7 = scalar_select 0, %s6, %s4
  // Predicated region
  $region2: #{kb_wic_forward.12} parent=0 // pred_check
    _
  $region3: #{kb_wic_forward.12} parent=0 // pred_check_branch
    %9 = sbr.rel (0) target = $region5
  $region4: #{kb_wic_forward.12} parent=0 // pred_region
    _
  $region5: #{kb_wic_forward.12} parent=0 // pred_fallthru
    _
  // Predicated region
  $region6: #{kb_wic_forward.12} parent=0 // pred_check
    _
  $region7: #{kb_wic_forward.12} parent=0 // pred_check_branch
    %11 = sbr.rel (0) target = $region9
  $region8: #{kb_wic_forward.12} parent=0 // pred_region
    _
  $region9: #{kb_wic_forward.12} parent=0 // pred_fallthru
    _
  // Predicated region
  $region10: #{kb_wic_forward.12} parent=0 // pred_check
    _
  $region11: #{kb_wic_forward.12} parent=0 // pred_check_branch
    %13 = sbr.rel (0) target = $region13
  $region12: #{kb_wic_forward.12} parent=0 // pred_region
    _
  $region13: #{kb_wic_forward.12} parent=0 // pred_fallthru
    _
  %p15 = scmp.eq.s32.totalorder 0, 0
  // Predicated region
  $region14: #{kb_wic_forward.12} parent=0 // pred_check
    %p16 = pneg %p15
  $region15: #{kb_wic_forward.12} parent=0 // pred_check_branch
    %18 = sbr.rel (%p16) target = $region17
  $region16: #{kb_wic_forward.12} parent=0 // pred_region
    %19 = vst [vmem:[#allocation2] sm:$0xff] 0.0
    %20 = vst [vmem:[#allocation2 + $0x8] sm:$0xff] 0.0
    %21 = vst [vmem:[#allocation2 + $0x10] sm:$0xff] 0.0
    %22 = vst [vmem:[#allocation2 + $0x18] sm:$0xff] 0.0
    %23 = vst [vmem:[#allocation2 + $0x20] sm:$0xff] 0.0
    %24 = vst [vmem:[#allocation2 + $0x28] sm:$0xff] 0.0
  $region17: #{kb_wic_forward.12} parent=0 // pred_fallthru
    _
  %v25 = vld [vmem:[#allocation2] sm:$0xff]
  %v26 = vld [vmem:[#allocation2 + $0x8] sm:$0xff]
  %v27 = vld [vmem:[#allocation2 + $0x10] sm:$0xff]
  %v28 = vld [vmem:[#allocation2 + $0x18] sm:$0xff]
  %v29 = vld [vmem:[#allocation2 + $0x20] sm:$0xff]
  %v30 = vld [vmem:[#allocation2 + $0x28] sm:$0xff]
  %v31 = vld [vmem:[%s0] sm:$0xf]
  %v32 = vld [vmem:[%s0 + $0x4] sm:$0xf]
  %v33 = vld [vmem:[%s1] sm:$0xff]
  %v34 = vld [vmem:[%s1 + $0x8] sm:$0xf]
  %v35 = vld [vmem:[%s1 + $0xc] sm:$0xff]
  %v36 = vld [vmem:[%s1 + $0x14] sm:$0xf]
  %v37 = vld [vmem:[%s1 + $0x18] sm:$0xff]
  %v38 = vld [vmem:[%s1 + $0x20] sm:$0xf]
  %v39 = vld [vmem:[%s1 + $0x24] sm:$0xff]
  %v40 = vld [vmem:[%s1 + $0x2c] sm:$0xf]
  %v41 = vld [vmem:[%s1 + $0x30] sm:$0xff]
  %v42 = vld [vmem:[%s1 + $0x38] sm:$0xf]
  %v43 = vld [vmem:[%s1 + $0x3c] sm:$0xff]
  %v44 = vld [vmem:[%s1 + $0x44] sm:$0xf]
  %v45 = vld [vmem:[%s1 + $0x48] sm:$0xff]
  %v46 = vld [vmem:[%s1 + $0x50] sm:$0xf]
  %v47 = vld [vmem:[%s1 + $0x54] sm:$0xff]
  %v48 = vld [vmem:[%s1 + $0x5c] sm:$0xf]
  %v49 = vld [vmem:[%s1 + $0x60] sm:$0xff]
  %v50 = vld [vmem:[%s1 + $0x68] sm:$0xf]
  %v51 = vld [vmem:[%s1 + $0x6c] sm:$0xff]
  %v52 = vld [vmem:[%s1 + $0x74] sm:$0xf]
  %v53 = vld [vmem:[%s1 + $0x78] sm:$0xff]
  %v54 = vld [vmem:[%s1 + $0x80] sm:$0xf]
  %v55 = vld [vmem:[%s1 + $0x84] sm:$0xff]
  %v56 = vld [vmem:[%s1 + $0x8c] sm:$0xf]
  %v57 = vld [vmem:[%s1 + $0x90] sm:$0xff]
  %v58 = vld [vmem:[%s1 + $0x98] sm:$0xf]
  %v59 = vld [vmem:[%s1 + $0x9c] sm:$0xff]
  %v60 = vld [vmem:[%s1 + $0xa4] sm:$0xf]
  %v61 = vld [vmem:[%s1 + $0xa8] sm:$0xff]
  %v62 = vld [vmem:[%s1 + $0xb0] sm:$0xf]
  %v63 = vld [vmem:[%s1 + $0xb4] sm:$0xff]
  %v64 = vld [vmem:[%s1 + $0xbc] sm:$0xf]
  %v67 = vunpack.c.l.b16 %v31
  %v68 = vunpack.c.l.b16 %v32
  %v69 = vpack.c.b16 %v68, %v67
  %v103 = vunpack.c.l.b16 %v33
  %v104 = vunpack.c.h.b16 %v33
  %v105 = vunpack.c.l.b16 %v34
  %v106 = vunpack.c.l.b16 %v35
  %v107 = vunpack.c.h.b16 %v35
  %v108 = vunpack.c.l.b16 %v36
  %v109 = vunpack.c.l.b16 %v37
  %v110 = vunpack.c.h.b16 %v37
  %v111 = vunpack.c.l.b16 %v38
  %v112 = vunpack.c.l.b16 %v39
  %v113 = vunpack.c.h.b16 %v39
  %v114 = vunpack.c.l.b16 %v40
  %v115 = vunpack.c.l.b16 %v41
  %v116 = vunpack.c.h.b16 %v41
  %v117 = vunpack.c.l.b16 %v42
  %v118 = vunpack.c.l.b16 %v43
  %v119 = vunpack.c.h.b16 %v43
  %v120 = vunpack.c.l.b16 %v44
  %v121 = vunpack.c.l.b16 %v45
  %v122 = vunpack.c.h.b16 %v45
  %v123 = vunpack.c.l.b16 %v46
  %v124 = vunpack.c.l.b16 %v47
  %v125 = vunpack.c.h.b16 %v47
  %v126 = vunpack.c.l.b16 %v48
  %v127 = vunpack.c.l.b16 %v49
  %v128 = vunpack.c.h.b16 %v49
  %v129 = vunpack.c.l.b16 %v50
  %v130 = vunpack.c.l.b16 %v51
  %v131 = vunpack.c.h.b16 %v51
  %v132 = vunpack.c.l.b16 %v52
  %v133 = vunpack.c.l.b16 %v53
  %v134 = vunpack.c.h.b16 %v53
  %v135 = vunpack.c.l.b16 %v54
  %v136 = vunpack.c.l.b16 %v55
  %v137 = vunpack.c.h.b16 %v55
  %v138 = vunpack.c.l.b16 %v56
  %v139 = vunpack.c.l.b16 %v57
  %v140 = vunpack.c.h.b16 %v57
  %v141 = vunpack.c.l.b16 %v58
  %v142 = vunpack.c.l.b16 %v59
  %v143 = vunpack.c.h.b16 %v59
  %v144 = vunpack.c.l.b16 %v60
  %v145 = vunpack.c.l.b16 %v61
  %v146 = vunpack.c.h.b16 %v61
  %v147 = vunpack.c.l.b16 %v62
  %v148 = vunpack.c.l.b16 %v63
  %v149 = vunpack.c.h.b16 %v63
  %v150 = vunpack.c.l.b16 %v64
  %v151 = vpack.c.b16 %v106, %v103
  %v152 = vpack.c.b16 %v107, %v104
  %v153 = vpack.c.b16 %v108, %v105
  %v154 = vpack.c.b16 %v112, %v109
  %v155 = vpack.c.b16 %v113, %v110
  %v156 = vpack.c.b16 %v114, %v111
  %v157 = vpack.c.b16 %v118, %v115
  %v158 = vpack.c.b16 %v119, %v116
  %v159 = vpack.c.b16 %v120, %v117
  %v160 = vpack.c.b16 %v124, %v121
  %v161 = vpack.c.b16 %v125, %v122
  %v162 = vpack.c.b16 %v126, %v123
  %v163 = vpack.c.b16 %v130, %v127
  %v164 = vpack.c.b16 %v131, %v128
  %v165 = vpack.c.b16 %v132, %v129
  %v166 = vpack.c.b16 %v136, %v133
  %v167 = vpack.c.b16 %v137, %v134
  %v168 = vpack.c.b16 %v138, %v135
  %v169 = vpack.c.b16 %v142, %v139
  %v170 = vpack.c.b16 %v143, %v140
  %v171 = vpack.c.b16 %v144, %v141
  %v172 = vpack.c.b16 %v148, %v145
  %v173 = vpack.c.b16 %v149, %v146
  %v174 = vpack.c.b16 %v150, %v147
  %199 = vmatprep.subr.bf16.mxu0 %v152
  %200 = vmatpush1.bf16.msra.mxu0 %v151
  %201 = vmatprep.subr.bf16.mxu0 %v155
  %202 = vmatpush1.bf16.msra.mxu0 %v154
  %203 = vmatprep.subr.bf16.mxu0 %v158
  %204 = vmatpush1.bf16.msra.mxu0 %v157
  %205 = vmatprep.subr.bf16.mxu0 %v161
  %206 = vmatpush1.bf16.msra.mxu0 %v160
  %207 = vmatprep.subr.bf16.mxu0 %v164
  %208 = vmatpush1.bf16.msra.mxu0 %v163
  %209 = vmatprep.subr.bf16.mxu0 %v167
  %210 = vmatpush1.bf16.msra.mxu0 %v166
  %211 = vmatprep.subr.bf16.mxu0 %v170
  %212 = vmatpush1.bf16.msra.mxu0 %v169
  %213 = vmatprep.subr.bf16.mxu0 %v173
  %214 = vmatpush1.bf16.msra.mxu0 %v172
  %215 = vmatprep.subr.bf16.mxu0 0
  %216 = vmatpush1.bf16.msra.mxu0 0
  %217 = vmatprep.subr.bf16.mxu0 0
  %218 = vmatpush1.bf16.msra.mxu0 0
  %219 = vmatprep.subr.bf16.mxu0 0
  %220 = vmatpush1.bf16.msra.mxu0 0
  %221 = vmatprep.subr.bf16.mxu0 0
  %222 = vmatpush1.bf16.msra.mxu0 0
  %223 = vmatprep.subr.bf16.mxu0 0
  %224 = vmatpush1.bf16.msra.mxu0 0
  %225 = vmatprep.subr.bf16.mxu0 0
  %226 = vmatpush1.bf16.msra.mxu0 0
  %227 = vmatprep.subr.bf16.mxu0 0
  %228 = vmatpush1.bf16.msra.mxu0 0
  %229 = vmatprep.subr.bf16.mxu0 0
  %230 = vmatpush1.bf16.msra.mxu0 0
  %231 = vmatprep.mubr.bf16.mxu0 0
  %232 = vmatmul.mubr.bf16.gmra.mrb[0].mxu0 %v69
  %v233 = vpop.f32.mrb[0].mxu0
  %v234 = vadd.f32 0.0, %v233
  %v235 = vpop.f32.mrb[0].mxu0
  %v236 = vadd.f32 0.0, %v235
  %v237 = vpop.f32.mrb[0].mxu0
  %v238 = vadd.f32 0.0, %v237
  %v239 = vpop.f32.mrb[0].mxu0
  %v240 = vadd.f32 0.0, %v239
  %241 = vdwg.mxu0
  %242 = vmatprep.subr.bf16.mxu0 0
  %243 = vmatpush1.bf16.msra.mxu0 %v153
  %244 = vmatprep.subr.bf16.mxu0 0
  %245 = vmatpush1.bf16.msra.mxu0 %v156
  %246 = vmatprep.subr.bf16.mxu0 0
  %247 = vmatpush1.bf16.msra.mxu0 %v159
  %248 = vmatprep.subr.bf16.mxu0 0
  %249 = vmatpush1.bf16.msra.mxu0 %v162
  %250 = vmatprep.subr.bf16.mxu0 0
  %251 = vmatpush1.bf16.msra.mxu0 %v165
  %252 = vmatprep.subr.bf16.mxu0 0
  %253 = vmatpush1.bf16.msra.mxu0 %v168
  %254 = vmatprep.subr.bf16.mxu0 0
  %255 = vmatpush1.bf16.msra.mxu0 %v171
  %256 = vmatprep.subr.bf16.mxu0 0
  %257 = vmatpush1.bf16.msra.mxu0 %v174
  %258 = vmatprep.subr.bf16.mxu0 0
  %259 = vmatpush1.bf16.msra.mxu0 0
  %260 = vmatprep.subr.bf16.mxu0 0
  %261 = vmatpush1.bf16.msra.mxu0 0
  %262 = vmatprep.subr.bf16.mxu0 0
  %263 = vmatpush1.bf16.msra.mxu0 0
  %264 = vmatprep.subr.bf16.mxu0 0
  %265 = vmatpush1.bf16.msra.mxu0 0
  %266 = vmatprep.subr.bf16.mxu0 0
  %267 = vmatpush1.bf16.msra.mxu0 0
  %268 = vmatprep.subr.bf16.mxu0 0
  %269 = vmatpush1.bf16.msra.mxu0 0
  %270 = vmatprep.subr.bf16.mxu0 0
  %271 = vmatpush1.bf16.msra.mxu0 0
  %272 = vmatprep.subr.bf16.mxu0 0
  %273 = vmatpush1.bf16.msra.mxu0 0
  %274 = vmatprep.mubr.bf16.mxu0 0
  %275 = vmatmul.mubr.bf16.gmra.mrb[0].mxu0 %v69
  %v276 = vpop.f32.mrb[0].mxu0
  %v277 = vadd.f32 0.0, %v276
  %v278 = vpop.f32.mrb[0].mxu0
  %v279 = vpop.f32.mrb[0].mxu0
  %v280 = vadd.f32 0.0, %v279
  %v281 = vpop.f32.mrb[0].mxu0
  %282 = vdwg.mxu0
  %v283 = vadd.f32 %v25, %v234
  %v284 = vadd.f32 %v26, %v236
  %v285 = vadd.f32 %v27, %v277
  %v286 = vadd.f32 %v28, %v238
  %v287 = vadd.f32 %v29, %v240
  %v288 = vadd.f32 %v30, %v280
  %289 = vst [vmem:[#allocation2] sm:$0xff] %v283
  %290 = vst [vmem:[#allocation2 + $0x8] sm:$0xff] %v284
  %291 = vst [vmem:[#allocation2 + $0x10] sm:$0xff] %v285
  %292 = vst [vmem:[#allocation2 + $0x18] sm:$0xff] %v286
  %293 = vst [vmem:[#allocation2 + $0x20] sm:$0xff] %v287
  %294 = vst [vmem:[#allocation2 + $0x28] sm:$0xff] %v288
  // Predicated region
  $region18: #{kb_wic_forward.12} parent=0 // pred_check
    %p295 = pneg %p15
  $region19: #{kb_wic_forward.12} parent=0 // pred_check_branch
    %297 = sbr.rel (%p295) target = $region21
  $region20: #{kb_wic_forward.12} parent=0 // pred_region
    %v298 = vld [vmem:[#allocation2] sm:$0xff]
    %v299 = vld [vmem:[#allocation2 + $0x8] sm:$0xff]
    %v300 = vld [vmem:[#allocation2 + $0x10] sm:$0xff]
    %v301 = vld [vmem:[#allocation2 + $0x18] sm:$0xff]
    %v302 = vld [vmem:[#allocation2 + $0x20] sm:$0xff]
    %v303 = vld [vmem:[#allocation2 + $0x28] sm:$0xff]
    %v304 = vld [vmem:[%s2] sm:$0x7]
    %v306 = vlaneseq
    %v307 = vshrl.u32 %v306, 7
    %v308 = vsub.s32 0, %v307
    %v309 = vrot.slane %v304, %v308
    %v310 = vlaneseq
    %v311 = vshrl.u32 %v310, 7
    %v312 = vsub.s32 1, %v311
    %v313 = vrot.slane %v304, %v312
    %v314 = vlaneseq
    %v315 = vshrl.u32 %v314, 7
    %v316 = vsub.s32 2, %v315
    %v317 = vrot.slane %v304, %v316
    %v321 = vadd.f32 %v298, %v309
    %v322 = vadd.f32 %v299, %v313
    %v323 = vadd.f32 %v300, %v317
    %v324 = vadd.f32 %v301, %v309
    %v325 = vadd.f32 %v302, %v313
    %v326 = vadd.f32 %v303, %v317
    %v327 = vpack.c.bf16 %v324, %v321
    %v328 = vpack.c.bf16 %v325, %v322
    %v329 = vpack.c.bf16 %v326, %v323
    %v333 = vunpack.c.l.b16 %v327
    %v334 = vunpack.c.l.b16 %v328
    %v335 = vunpack.c.l.b16 %v329
    %v336 = vunpack.c.h.b16 %v327
    %v337 = vunpack.c.h.b16 %v328
    %v338 = vunpack.c.h.b16 %v329
    %v339 = vpack.c.b16 %v334, %v333
    %v340 = vpack.c.b16 %v335, %v335
    %v341 = vpack.c.b16 %v337, %v336
    %v342 = vpack.c.b16 %v338, %v338
    %347 = vst [vmem:[%s3] sm:$0xff] %v339
    %348 = vst [vmem:[%s3 + $0x8] sm:$0xf] %v340
    %349 = vst [vmem:[%s3 + $0xc] sm:$0xff] %v341
    %350 = vst [vmem:[%s3 + $0x14] sm:$0xf] %v342
  $region21: #{kb_wic_forward.12} parent=0 // pred_fallthru
    _
  // Predicated region
  $region22: #{kb_wic_forward.12} parent=0 // pred_check
    _
  $region23: #{kb_wic_forward.12} parent=0 // pred_check_branch
    %352 = sbr.rel (0) target = $region25
  $region24: #{kb_wic_forward.12} parent=0 // pred_region
    _
  $region25: #{kb_wic_forward.12} parent=0 // pred_fallthru
    _
  // Predicated region
  $region26: #{kb_wic_forward.12} parent=0 // pred_check
    _
  $region27: #{kb_wic_forward.12} parent=0 // pred_check_branch
    %354 = sbr.rel (0) target = $region29
  $region28: #{kb_wic_forward.12} parent=0 // pred_region
    _
  $region29: #{kb_wic_forward.12} parent=0 // pred_fallthru
    _

// kernel: kb_wic_forward.15
$region0: #{kb_wic_forward.15}
  #allocation0 [shape = 'u32[]', space=smem, size = 0x4, offset = 0x4, fixed_abs, tag = 'smem constant byte address 0x4 - core index']
  #allocation1 [shape = 'u32[144,128]{1,0:T(1,128)}', space=vmem, size = 0x12000, scoped, tag = 'internal scratch']
  #allocation2 [shape = 'f32[16,512]{1,0:T(8,128)}', space=vmem, size = 0x8000, scoped, tag = 'scratch operand']
  %s0 = inlined_call_operand.vmem [shape: bf16[16,128], index: 0, kind: input, shape index: {}]
  %s1 = inlined_call_operand.vmem [shape: bf16[128,512], index: 1, kind: input, shape index: {}]
  %s2 = inlined_call_operand.vmem [shape: f32[1,512], index: 2, kind: input, shape index: {}]
  %s3 = inlined_call_operand.vmem [shape: bf16[16,512], index: 3, kind: output, shape index: {}]
  %s4 = sld [smem:[#allocation0]]
  $region30: #{kb_wic_forward.15} parent=0
    _
  %s6 = ssub.s32 1, %s4
  %s7 = scalar_select 0, %s6, %s4
  // Predicated region
  $region2: #{kb_wic_forward.15} parent=0 // pred_check
    _
  $region3: #{kb_wic_forward.15} parent=0 // pred_check_branch
    %9 = sbr.rel (0) target = $region5
  $region4: #{kb_wic_forward.15} parent=0 // pred_region
    _
  $region5: #{kb_wic_forward.15} parent=0 // pred_fallthru
    _
  // Predicated region
  $region6: #{kb_wic_forward.15} parent=0 // pred_check
    _
  $region7: #{kb_wic_forward.15} parent=0 // pred_check_branch
    %11 = sbr.rel (0) target = $region9
  $region8: #{kb_wic_forward.15} parent=0 // pred_region
    _
  $region9: #{kb_wic_forward.15} parent=0 // pred_fallthru
    _
  // Predicated region
  $region10: #{kb_wic_forward.15} parent=0 // pred_check
    _
  $region11: #{kb_wic_forward.15} parent=0 // pred_check_branch
    %13 = sbr.rel (0) target = $region13
  $region12: #{kb_wic_forward.15} parent=0 // pred_region
    _
  $region13: #{kb_wic_forward.15} parent=0 // pred_fallthru
    _
  %p15 = scmp.eq.s32.totalorder 0, 0
  // Predicated region
  $region14: #{kb_wic_forward.15} parent=0 // pred_check
    %p16 = pneg %p15
  $region15: #{kb_wic_forward.15} parent=0 // pred_check_branch
    %18 = sbr.rel (%p16) target = $region17
  $region16: #{kb_wic_forward.15} parent=0 // pred_region
    %19 = vst [vmem:[#allocation2] sm:$0xff] 0.0
    %20 = vst [vmem:[#allocation2 + $0x8] sm:$0xff] 0.0
    %21 = vst [vmem:[#allocation2 + $0x10] sm:$0xff] 0.0
    %22 = vst [vmem:[#allocation2 + $0x18] sm:$0xff] 0.0
    %23 = vst [vmem:[#allocation2 + $0x20] sm:$0xff] 0.0
    %24 = vst [vmem:[#allocation2 + $0x28] sm:$0xff] 0.0
    %25 = vst [vmem:[#allocation2 + $0x30] sm:$0xff] 0.0
    %26 = vst [vmem:[#allocation2 + $0x38] sm:$0xff] 0.0
  $region17: #{kb_wic_forward.15} parent=0 // pred_fallthru
    _
  %v27 = vld [vmem:[#allocation2] sm:$0xff]
  %v28 = vld [vmem:[#allocation2 + $0x8] sm:$0xff]
  %v29 = vld [vmem:[#allocation2 + $0x10] sm:$0xff]
  %v30 = vld [vmem:[#allocation2 + $0x18] sm:$0xff]
  %v31 = vld [vmem:[#allocation2 + $0x20] sm:$0xff]
  %v32 = vld [vmem:[#allocation2 + $0x28] sm:$0xff]
  %v33 = vld [vmem:[#allocation2 + $0x30] sm:$0xff]
  %v34 = vld [vmem:[#allocation2 + $0x38] sm:$0xff]
  %v35 = vld [vmem:[%s0] sm:$0xf]
  %v36 = vld [vmem:[%s0 + $0x4] sm:$0xf]
  %v37 = vld [vmem:[%s1] sm:$0xff]
  %v38 = vld [vmem:[%s1 + $0x8] sm:$0xff]
  %v39 = vld [vmem:[%s1 + $0x10] sm:$0xff]
  %v40 = vld [vmem:[%s1 + $0x18] sm:$0xff]
  %v41 = vld [vmem:[%s1 + $0x20] sm:$0xff]
  %v42 = vld [vmem:[%s1 + $0x28] sm:$0xff]
  %v43 = vld [vmem:[%s1 + $0x30] sm:$0xff]
  %v44 = vld [vmem:[%s1 + $0x38] sm:$0xff]
  %v45 = vld [vmem:[%s1 + $0x40] sm:$0xff]
  %v46 = vld [vmem:[%s1 + $0x48] sm:$0xff]
  %v47 = vld [vmem:[%s1 + $0x50] sm:$0xff]
  %v48 = vld [vmem:[%s1 + $0x58] sm:$0xff]
  %v49 = vld [vmem:[%s1 + $0x60] sm:$0xff]
  %v50 = vld [vmem:[%s1 + $0x68] sm:$0xff]
  %v51 = vld [vmem:[%s1 + $0x70] sm:$0xff]
  %v52 = vld [vmem:[%s1 + $0x78] sm:$0xff]
  %v53 = vld [vmem:[%s1 + $0x80] sm:$0xff]
  %v54 = vld [vmem:[%s1 + $0x88] sm:$0xff]
  %v55 = vld [vmem:[%s1 + $0x90] sm:$0xff]
  %v56 = vld [vmem:[%s1 + $0x98] sm:$0xff]
  %v57 = vld [vmem:[%s1 + $0xa0] sm:$0xff]
  %v58 = vld [vmem:[%s1 + $0xa8] sm:$0xff]
  %v59 = vld [vmem:[%s1 + $0xb0] sm:$0xff]
  %v60 = vld [vmem:[%s1 + $0xb8] sm:$0xff]
  %v61 = vld [vmem:[%s1 + $0xc0] sm:$0xff]
  %v62 = vld [vmem:[%s1 + $0xc8] sm:$0xff]
  %v63 = vld [vmem:[%s1 + $0xd0] sm:$0xff]
  %v64 = vld [vmem:[%s1 + $0xd8] sm:$0xff]
  %v65 = vld [vmem:[%s1 + $0xe0] sm:$0xff]
  %v66 = vld [vmem:[%s1 + $0xe8] sm:$0xff]
  %v67 = vld [vmem:[%s1 + $0xf0] sm:$0xff]
  %v68 = vld [vmem:[%s1 + $0xf8] sm:$0xff]
  %v71 = vunpack.c.l.b16 %v35
  %v72 = vunpack.c.l.b16 %v36
  %v73 = vpack.c.b16 %v72, %v71
  %v107 = vunpack.c.l.b16 %v37
  %v108 = vunpack.c.h.b16 %v37
  %v109 = vunpack.c.l.b16 %v38
  %v110 = vunpack.c.h.b16 %v38
  %v111 = vunpack.c.l.b16 %v39
  %v112 = vunpack.c.h.b16 %v39
  %v113 = vunpack.c.l.b16 %v40
  %v114 = vunpack.c.h.b16 %v40
  %v115 = vunpack.c.l.b16 %v41
  %v116 = vunpack.c.h.b16 %v41
  %v117 = vunpack.c.l.b16 %v42
  %v118 = vunpack.c.h.b16 %v42
  %v119 = vunpack.c.l.b16 %v43
  %v120 = vunpack.c.h.b16 %v43
  %v121 = vunpack.c.l.b16 %v44
  %v122 = vunpack.c.h.b16 %v44
  %v123 = vunpack.c.l.b16 %v45
  %v124 = vunpack.c.h.b16 %v45
  %v125 = vunpack.c.l.b16 %v46
  %v126 = vunpack.c.h.b16 %v46
  %v127 = vunpack.c.l.b16 %v47
  %v128 = vunpack.c.h.b16 %v47
  %v129 = vunpack.c.l.b16 %v48
  %v130 = vunpack.c.h.b16 %v48
  %v131 = vunpack.c.l.b16 %v49
  %v132 = vunpack.c.h.b16 %v49
  %v133 = vunpack.c.l.b16 %v50
  %v134 = vunpack.c.h.b16 %v50
  %v135 = vunpack.c.l.b16 %v51
  %v136 = vunpack.c.h.b16 %v51
  %v137 = vunpack.c.l.b16 %v52
  %v138 = vunpack.c.h.b16 %v52
  %v139 = vunpack.c.l.b16 %v53
  %v140 = vunpack.c.h.b16 %v53
  %v141 = vunpack.c.l.b16 %v54
  %v142 = vunpack.c.h.b16 %v54
  %v143 = vunpack.c.l.b16 %v55
  %v144 = vunpack.c.h.b16 %v55
  %v145 = vunpack.c.l.b16 %v56
  %v146 = vunpack.c.h.b16 %v56
  %v147 = vunpack.c.l.b16 %v57
  %v148 = vunpack.c.h.b16 %v57
  %v149 = vunpack.c.l.b16 %v58
  %v150 = vunpack.c.h.b16 %v58
  %v151 = vunpack.c.l.b16 %v59
  %v152 = vunpack.c.h.b16 %v59
  %v153 = vunpack.c.l.b16 %v60
  %v154 = vunpack.c.h.b16 %v60
  %v155 = vunpack.c.l.b16 %v61
  %v156 = vunpack.c.h.b16 %v61
  %v157 = vunpack.c.l.b16 %v62
  %v158 = vunpack.c.h.b16 %v62
  %v159 = vunpack.c.l.b16 %v63
  %v160 = vunpack.c.h.b16 %v63
  %v161 = vunpack.c.l.b16 %v64
  %v162 = vunpack.c.h.b16 %v64
  %v163 = vunpack.c.l.b16 %v65
  %v164 = vunpack.c.h.b16 %v65
  %v165 = vunpack.c.l.b16 %v66
  %v166 = vunpack.c.h.b16 %v66
  %v167 = vunpack.c.l.b16 %v67
  %v168 = vunpack.c.h.b16 %v67
  %v169 = vunpack.c.l.b16 %v68
  %v170 = vunpack.c.h.b16 %v68
  %v171 = vpack.c.b16 %v111, %v107
  %v172 = vpack.c.b16 %v112, %v108
  %v173 = vpack.c.b16 %v113, %v109
  %v174 = vpack.c.b16 %v114, %v110
  %v175 = vpack.c.b16 %v119, %v115
  %v176 = vpack.c.b16 %v120, %v116
  %v177 = vpack.c.b16 %v121, %v117
  %v178 = vpack.c.b16 %v122, %v118
  %v179 = vpack.c.b16 %v127, %v123
  %v180 = vpack.c.b16 %v128, %v124
  %v181 = vpack.c.b16 %v129, %v125
  %v182 = vpack.c.b16 %v130, %v126
  %v183 = vpack.c.b16 %v135, %v131
  %v184 = vpack.c.b16 %v136, %v132
  %v185 = vpack.c.b16 %v137, %v133
  %v186 = vpack.c.b16 %v138, %v134
  %v187 = vpack.c.b16 %v143, %v139
  %v188 = vpack.c.b16 %v144, %v140
  %v189 = vpack.c.b16 %v145, %v141
  %v190 = vpack.c.b16 %v146, %v142
  %v191 = vpack.c.b16 %v151, %v147
  %v192 = vpack.c.b16 %v152, %v148
  %v193 = vpack.c.b16 %v153, %v149
  %v194 = vpack.c.b16 %v154, %v150
  %v195 = vpack.c.b16 %v159, %v155
  %v196 = vpack.c.b16 %v160, %v156
  %v197 = vpack.c.b16 %v161, %v157
  %v198 = vpack.c.b16 %v162, %v158
  %v199 = vpack.c.b16 %v167, %v163
  %v200 = vpack.c.b16 %v168, %v164
  %v201 = vpack.c.b16 %v169, %v165
  %v202 = vpack.c.b16 %v170, %v166
  %235 = vmatprep.subr.bf16.mxu0 %v172
  %236 = vmatpush1.bf16.msra.mxu0 %v171
  %237 = vmatprep.subr.bf16.mxu0 %v176
  %238 = vmatpush1.bf16.msra.mxu0 %v175
  %239 = vmatprep.subr.bf16.mxu0 %v180
  %240 = vmatpush1.bf16.msra.mxu0 %v179
  %241 = vmatprep.subr.bf16.mxu0 %v184
  %242 = vmatpush1.bf16.msra.mxu0 %v183
  %243 = vmatprep.subr.bf16.mxu0 %v188
  %244 = vmatpush1.bf16.msra.mxu0 %v187
  %245 = vmatprep.subr.bf16.mxu0 %v192
  %246 = vmatpush1.bf16.msra.mxu0 %v191
  %247 = vmatprep.subr.bf16.mxu0 %v196
  %248 = vmatpush1.bf16.msra.mxu0 %v195
  %249 = vmatprep.subr.bf16.mxu0 %v200
  %250 = vmatpush1.bf16.msra.mxu0 %v199
  %251 = vmatprep.subr.bf16.mxu0 0
  %252 = vmatpush1.bf16.msra.mxu0 0
  %253 = vmatprep.subr.bf16.mxu0 0
  %254 = vmatpush1.bf16.msra.mxu0 0
  %255 = vmatprep.subr.bf16.mxu0 0
  %256 = vmatpush1.bf16.msra.mxu0 0
  %257 = vmatprep.subr.bf16.mxu0 0
  %258 = vmatpush1.bf16.msra.mxu0 0
  %259 = vmatprep.subr.bf16.mxu0 0
  %260 = vmatpush1.bf16.msra.mxu0 0
  %261 = vmatprep.subr.bf16.mxu0 0
  %262 = vmatpush1.bf16.msra.mxu0 0
  %263 = vmatprep.subr.bf16.mxu0 0
  %264 = vmatpush1.bf16.msra.mxu0 0
  %265 = vmatprep.subr.bf16.mxu0 0
  %266 = vmatpush1.bf16.msra.mxu0 0
  %267 = vmatprep.mubr.bf16.mxu0 0
  %268 = vmatmul.mubr.bf16.gmra.mrb[0].mxu0 %v73
  %v269 = vpop.f32.mrb[0].mxu0
  %v270 = vadd.f32 0.0, %v269
  %v271 = vpop.f32.mrb[0].mxu0
  %v272 = vadd.f32 0.0, %v271
  %v273 = vpop.f32.mrb[0].mxu0
  %v274 = vadd.f32 0.0, %v273
  %v275 = vpop.f32.mrb[0].mxu0
  %v276 = vadd.f32 0.0, %v275
  %277 = vdwg.mxu0
  %278 = vmatprep.subr.bf16.mxu0 %v174
  %279 = vmatpush1.bf16.msra.mxu0 %v173
  %280 = vmatprep.subr.bf16.mxu0 %v178
  %281 = vmatpush1.bf16.msra.mxu0 %v177
  %282 = vmatprep.subr.bf16.mxu0 %v182
  %283 = vmatpush1.bf16.msra.mxu0 %v181
  %284 = vmatprep.subr.bf16.mxu0 %v186
  %285 = vmatpush1.bf16.msra.mxu0 %v185
  %286 = vmatprep.subr.bf16.mxu0 %v190
  %287 = vmatpush1.bf16.msra.mxu0 %v189
  %288 = vmatprep.subr.bf16.mxu0 %v194
  %289 = vmatpush1.bf16.msra.mxu0 %v193
  %290 = vmatprep.subr.bf16.mxu0 %v198
  %291 = vmatpush1.bf16.msra.mxu0 %v197
  %292 = vmatprep.subr.bf16.mxu0 %v202
  %293 = vmatpush1.bf16.msra.mxu0 %v201
  %294 = vmatprep.subr.bf16.mxu0 0
  %295 = vmatpush1.bf16.msra.mxu0 0
  %296 = vmatprep.subr.bf16.mxu0 0
  %297 = vmatpush1.bf16.msra.mxu0 0
  %298 = vmatprep.subr.bf16.mxu0 0
  %299 = vmatpush1.bf16.msra.mxu0 0
  %300 = vmatprep.subr.bf16.mxu0 0
  %301 = vmatpush1.bf16.msra.mxu0 0
  %302 = vmatprep.subr.bf16.mxu0 0
  %303 = vmatpush1.bf16.msra.mxu0 0
  %304 = vmatprep.subr.bf16.mxu0 0
  %305 = vmatpush1.bf16.msra.mxu0 0
  %306 = vmatprep.subr.bf16.mxu0 0
  %307 = vmatpush1.bf16.msra.mxu0 0
  %308 = vmatprep.subr.bf16.mxu0 0
  %309 = vmatpush1.bf16.msra.mxu0 0
  %310 = vmatprep.mubr.bf16.mxu0 0
  %311 = vmatmul.mubr.bf16.gmra.mrb[0].mxu0 %v73
  %v312 = vpop.f32.mrb[0].mxu0
  %v313 = vadd.f32 0.0, %v312
  %v314 = vpop.f32.mrb[0].mxu0
  %v315 = vadd.f32 0.0, %v314
  %v316 = vpop.f32.mrb[0].mxu0
  %v317 = vadd.f32 0.0, %v316
  %v318 = vpop.f32.mrb[0].mxu0
  %v319 = vadd.f32 0.0, %v318
  %320 = vdwg.mxu0
  %v321 = vadd.f32 %v27, %v270
  %v322 = vadd.f32 %v28, %v272
  %v323 = vadd.f32 %v29, %v313
  %v324 = vadd.f32 %v30, %v315
  %v325 = vadd.f32 %v31, %v274
  %v326 = vadd.f32 %v32, %v276
  %v327 = vadd.f32 %v33, %v317
  %v328 = vadd.f32 %v34, %v319
  %329 = vst [vmem:[#allocation2] sm:$0xff] %v321
  %330 = vst [vmem:[#allocation2 + $0x8] sm:$0xff] %v322
  %331 = vst [vmem:[#allocation2 + $0x10] sm:$0xff] %v323
  %332 = vst [vmem:[#allocation2 + $0x18] sm:$0xff] %v324
  %333 = vst [vmem:[#allocation2 + $0x20] sm:$0xff] %v325
  %334 = vst [vmem:[#allocation2 + $0x28] sm:$0xff] %v326
  %335 = vst [vmem:[#allocation2 + $0x30] sm:$0xff] %v327
  %336 = vst [vmem:[#allocation2 + $0x38] sm:$0xff] %v328
  // Predicated region
  $region18: #{kb_wic_forward.15} parent=0 // pred_check
    %p337 = pneg %p15
  $region19: #{kb_wic_forward.15} parent=0 // pred_check_branch
    %339 = sbr.rel (%p337) target = $region21
  $region20: #{kb_wic_forward.15} parent=0 // pred_region
    %v340 = vld [vmem:[#allocation2] sm:$0xff]
    %v341 = vld [vmem:[#allocation2 + $0x8] sm:$0xff]
    %v342 = vld [vmem:[#allocation2 + $0x10] sm:$0xff]
    %v343 = vld [vmem:[#allocation2 + $0x18] sm:$0xff]
    %v344 = vld [vmem:[#allocation2 + $0x20] sm:$0xff]
    %v345 = vld [vmem:[#allocation2 + $0x28] sm:$0xff]
    %v346 = vld [vmem:[#allocation2 + $0x30] sm:$0xff]
    %v347 = vld [vmem:[#allocation2 + $0x38] sm:$0xff]
    %v348 = vld [vmem:[%s2] sm:$0xf]
    %v350 = vlaneseq
    %v351 = vshrl.u32 %v350, 7
    %v352 = vsub.s32 0, %v351
    %v353 = vrot.slane %v348, %v352
    %v354 = vlaneseq
    %v355 = vshrl.u32 %v354, 7
    %v356 = vsub.s32 1, %v355
    %v357 = vrot.slane %v348, %v356
    %v358 = vlaneseq
    %v359 = vshrl.u32 %v358, 7
    %v360 = vsub.s32 2, %v359
    %v361 = vrot.slane %v348, %v360
    %v362 = vlaneseq
    %v363 = vshrl.u32 %v362, 7
    %v364 = vsub.s32 3, %v363
    %v365 = vrot.slane %v348, %v364
    %v370 = vadd.f32 %v340, %v353
    %v371 = vadd.f32 %v341, %v357
    %v372 = vadd.f32 %v342, %v361
    %v373 = vadd.f32 %v343, %v365
    %v374 = vadd.f32 %v344, %v353
    %v375 = vadd.f32 %v345, %v357
    %v376 = vadd.f32 %v346, %v361
    %v377 = vadd.f32 %v347, %v365
    %v378 = vmul.f32 %v370, 0.5
    %v379 = vmul.f32 %v371, 0.5
    %v380 = vmul.f32 %v372, 0.5
    %v381 = vmul.f32 %v373, 0.5
    %v382 = vmul.f32 %v374, 0.5
    %v383 = vmul.f32 %v375, 0.5
    %v384 = vmul.f32 %v376, 0.5
    %v385 = vmul.f32 %v377, 0.5
    %v386 = vmul.f32 %v370, 0.70710677
    %v387 = vmul.f32 %v371, 0.70710677
    %v388 = vmul.f32 %v372, 0.70710677
    %v389 = vmul.f32 %v373, 0.70710677
    %v390 = vmul.f32 %v374, 0.70710677
    %v391 = vmul.f32 %v375, 0.70710677
    %v392 = vmul.f32 %v376, 0.70710677
    %v393 = vmul.f32 %v377, 0.70710677
    %v394 = verf.f32.pop %v386
    %v395 = verf.f32.pop %v387
    %v396 = verf.f32.pop %v388
    %v397 = verf.f32.pop %v389
    %v398 = verf.f32.pop %v390
    %v399 = verf.f32.pop %v391
    %v400 = verf.f32.pop %v392
    %v401 = verf.f32.pop %v393
    %v402 = vadd.f32 %v394, 1.0
    %v403 = vadd.f32 %v395, 1.0
    %v404 = vadd.f32 %v396, 1.0
    %v405 = vadd.f32 %v397, 1.0
    %v406 = vadd.f32 %v398, 1.0
    %v407 = vadd.f32 %v399, 1.0
    %v408 = vadd.f32 %v400, 1.0
    %v409 = vadd.f32 %v401, 1.0
    %v410 = vmul.f32 %v378, %v402
    %v411 = vmul.f32 %v379, %v403
    %v412 = vmul.f32 %v380, %v404
    %v413 = vmul.f32 %v381, %v405
    %v414 = vmul.f32 %v382, %v406
    %v415 = vmul.f32 %v383, %v407
    %v416 = vmul.f32 %v384, %v408
    %v417 = vmul.f32 %v385, %v409
    %v418 = vpack.c.bf16 %v414, %v410
    %v419 = vpack.c.bf16 %v415, %v411
    %v420 = vpack.c.bf16 %v416, %v412
    %v421 = vpack.c.bf16 %v417, %v413
    %v426 = vunpack.c.l.b16 %v418
    %v427 = vunpack.c.l.b16 %v419
    %v428 = vunpack.c.l.b16 %v420
    %v429 = vunpack.c.l.b16 %v421
    %v430 = vunpack.c.h.b16 %v418
    %v431 = vunpack.c.h.b16 %v419
    %v432 = vunpack.c.h.b16 %v420
    %v433 = vunpack.c.h.b16 %v421
    %v434 = vpack.c.b16 %v427, %v426
    %v435 = vpack.c.b16 %v429, %v428
    %v436 = vpack.c.b16 %v431, %v430
    %v437 = vpack.c.b16 %v433, %v432
    %442 = vst [vmem:[%s3] sm:$0xff] %v434
    %443 = vst [vmem:[%s3 + $0x8] sm:$0xff] %v435
    %444 = vst [vmem:[%s3 + $0x10] sm:$0xff] %v436
    %445 = vst [vmem:[%s3 + $0x18] sm:$0xff] %v437
  $region21: #{kb_wic_forward.15} parent=0 // pred_fallthru
    _
  // Predicated region
  $region22: #{kb_wic_forward.15} parent=0 // pred_check
    _
  $region23: #{kb_wic_forward.15} parent=0 // pred_check_branch
    %447 = sbr.rel (0) target = $region25
  $region24: #{kb_wic_forward.15} parent=0 // pred_region
    _
  $region25: #{kb_wic_forward.15} parent=0 // pred_fallthru
    _
  // Predicated region
  $region26: #{kb_wic_forward.15} parent=0 // pred_check
    _
  $region27: #{kb_wic_forward.15} parent=0 // pred_check_branch
    %449 = sbr.rel (0) target = $region29
  $region28: #{kb_wic_forward.15} parent=0 // pred_region
    _
  $region29: #{kb_wic_forward.15} parent=0 // pred_fallthru
    _

// kernel: kb_wic_forward.16
$region0: #{kb_wic_forward.16}
  #allocation0 [shape = 'u32[]', space=smem, size = 0x4, offset = 0x4, fixed_abs, tag = 'smem constant byte address 0x4 - core index']
  #allocation1 [shape = 'u32[144,128]{1,0:T(1,128)}', space=vmem, size = 0x12000, scoped, tag = 'internal scratch']
  #allocation2 [shape = 'f32[16,128]{1,0:T(8,128)}', space=vmem, size = 0x2000, scoped, tag = 'scratch operand']
  %s0 = inlined_call_operand.vmem [shape: bf16[16,512], index: 0, kind: input, shape index: {}]
  %s1 = inlined_call_operand.vmem [shape: bf16[512,128], index: 1, kind: input, shape index: {}]
  %s2 = inlined_call_operand.vmem [shape: f32[1,128], index: 2, kind: input, shape index: {}]
  %s3 = inlined_call_operand.vmem [shape: bf16[16,128], index: 3, kind: input, shape index: {}]
  %s4 = inlined_call_operand.vmem [shape: f32[1,128], index: 4, kind: input, shape index: {}]
  %s5 = inlined_call_operand.vmem [shape: f32[1,128], index: 5, kind: input, shape index: {}]
  %s6 = inlined_call_operand.vmem [shape: bf16[16,128], index: 6, kind: output, shape index: {}]
  %s7 = sld [smem:[#allocation0]]
  $region42: #{kb_wic_forward.16} parent=0
    _
  %s9 = ssub.s32 1, %s7
  %s10 = scalar_select 0, %s9, %s7
  // Predicated region
  $region2: #{kb_wic_forward.16} parent=0 // pred_check
    _
  $region3: #{kb_wic_forward.16} parent=0 // pred_check_branch
    %12 = sbr.rel (0) target = $region5
  $region4: #{kb_wic_forward.16} parent=0 // pred_region
    _
  $region5: #{kb_wic_forward.16} parent=0 // pred_fallthru
    _
  // Predicated region
  $region6: #{kb_wic_forward.16} parent=0 // pred_check
    _
  $region7: #{kb_wic_forward.16} parent=0 // pred_check_branch
    %14 = sbr.rel (0) target = $region9
  $region8: #{kb_wic_forward.16} parent=0 // pred_region
    _
  $region9: #{kb_wic_forward.16} parent=0 // pred_fallthru
    _
  // Predicated region
  $region10: #{kb_wic_forward.16} parent=0 // pred_check
    _
  $region11: #{kb_wic_forward.16} parent=0 // pred_check_branch
    %16 = sbr.rel (0) target = $region13
  $region12: #{kb_wic_forward.16} parent=0 // pred_region
    _
  $region13: #{kb_wic_forward.16} parent=0 // pred_fallthru
    _
  // Predicated region
  $region14: #{kb_wic_forward.16} parent=0 // pred_check
    _
  $region15: #{kb_wic_forward.16} parent=0 // pred_check_branch
    %18 = sbr.rel (0) target = $region17
  $region16: #{kb_wic_forward.16} parent=0 // pred_region
    _
  $region17: #{kb_wic_forward.16} parent=0 // pred_fallthru
    _
  // Predicated region
  $region18: #{kb_wic_forward.16} parent=0 // pred_check
    _
  $region19: #{kb_wic_forward.16} parent=0 // pred_check_branch
    %20 = sbr.rel (0) target = $region21
  $region20: #{kb_wic_forward.16} parent=0 // pred_region
    _
  $region21: #{kb_wic_forward.16} parent=0 // pred_fallthru
    _
  // Predicated region
  $region22: #{kb_wic_forward.16} parent=0 // pred_check
    _
  $region23: #{kb_wic_forward.16} parent=0 // pred_check_branch
    %22 = sbr.rel (0) target = $region25
  $region24: #{kb_wic_forward.16} parent=0 // pred_region
    _
  $region25: #{kb_wic_forward.16} parent=0 // pred_fallthru
    _
  %p24 = scmp.eq.s32.totalorder 0, 0
  // Predicated region
  $region26: #{kb_wic_forward.16} parent=0 // pred_check
    %p25 = pneg %p24
  $region27: #{kb_wic_forward.16} parent=0 // pred_check_branch
    %27 = sbr.rel (%p25) target = $region29
  $region28: #{kb_wic_forward.16} parent=0 // pred_region
    %28 = vst [vmem:[#allocation2] sm:$0xff] 0.0
    %29 = vst [vmem:[#allocation2 + $0x8] sm:$0xff] 0.0
  $region29: #{kb_wic_forward.16} parent=0 // pred_fallthru
    _
  %v30 = vld [vmem:[#allocation2] sm:$0xff]
  %v31 = vld [vmem:[#allocation2 + $0x8] sm:$0xff]
  %v32 = vld [vmem:[%s0] sm:$0xff]
  %v33 = vld [vmem:[%s0 + $0x8] sm:$0xff]
  %v34 = vld [vmem:[%s0 + $0x10] sm:$0xff]
  %v35 = vld [vmem:[%s0 + $0x18] sm:$0xff]
  %v36 = vld [vmem:[%s1] sm:$0xf]
  %v37 = vld [vmem:[%s1 + $0x4] sm:$0xf]
  %v38 = vld [vmem:[%s1 + $0x8] sm:$0xf]
  %v39 = vld [vmem:[%s1 + $0xc] sm:$0xf]
  %v40 = vld [vmem:[%s1 + $0x10] sm:$0xf]
  %v41 = vld [vmem:[%s1 + $0x14] sm:$0xf]
  %v42 = vld [vmem:[%s1 + $0x18] sm:$0xf]
  %v43 = vld [vmem:[%s1 + $0x1c] sm:$0xf]
  %v44 = vld [vmem:[%s1 + $0x20] sm:$0xf]
  %v45 = vld [vmem:[%s1 + $0x24] sm:$0xf]
  %v46 = vld [vmem:[%s1 + $0x28] sm:$0xf]
  %v47 = vld [vmem:[%s1 + $0x2c] sm:$0xf]
  %v48 = vld [vmem:[%s1 + $0x30] sm:$0xf]
  %v49 = vld [vmem:[%s1 + $0x34] sm:$0xf]
  %v50 = vld [vmem:[%s1 + $0x38] sm:$0xf]
  %v51 = vld [vmem:[%s1 + $0x3c] sm:$0xf]
  %v52 = vld [vmem:[%s1 + $0x40] sm:$0xf]
  %v53 = vld [vmem:[%s1 + $0x44] sm:$0xf]
  %v54 = vld [vmem:[%s1 + $0x48] sm:$0xf]
  %v55 = vld [vmem:[%s1 + $0x4c] sm:$0xf]
  %v56 = vld [vmem:[%s1 + $0x50] sm:$0xf]
  %v57 = vld [vmem:[%s1 + $0x54] sm:$0xf]
  %v58 = vld [vmem:[%s1 + $0x58] sm:$0xf]
  %v59 = vld [vmem:[%s1 + $0x5c] sm:$0xf]
  %v60 = vld [vmem:[%s1 + $0x60] sm:$0xf]
  %v61 = vld [vmem:[%s1 + $0x64] sm:$0xf]
  %v62 = vld [vmem:[%s1 + $0x68] sm:$0xf]
  %v63 = vld [vmem:[%s1 + $0x6c] sm:$0xf]
  %v64 = vld [vmem:[%s1 + $0x70] sm:$0xf]
  %v65 = vld [vmem:[%s1 + $0x74] sm:$0xf]
  %v66 = vld [vmem:[%s1 + $0x78] sm:$0xf]
  %v67 = vld [vmem:[%s1 + $0x7c] sm:$0xf]
  %v68 = vld [vmem:[%s1 + $0x80] sm:$0xf]
  %v69 = vld [vmem:[%s1 + $0x84] sm:$0xf]
  %v70 = vld [vmem:[%s1 + $0x88] sm:$0xf]
  %v71 = vld [vmem:[%s1 + $0x8c] sm:$0xf]
  %v72 = vld [vmem:[%s1 + $0x90] sm:$0xf]
  %v73 = vld [vmem:[%s1 + $0x94] sm:$0xf]
  %v74 = vld [vmem:[%s1 + $0x98] sm:$0xf]
  %v75 = vld [vmem:[%s1 + $0x9c] sm:$0xf]
  %v76 = vld [vmem:[%s1 + $0xa0] sm:$0xf]
  %v77 = vld [vmem:[%s1 + $0xa4] sm:$0xf]
  %v78 = vld [vmem:[%s1 + $0xa8] sm:$0xf]
  %v79 = vld [vmem:[%s1 + $0xac] sm:$0xf]
  %v80 = vld [vmem:[%s1 + $0xb0] sm:$0xf]
  %v81 = vld [vmem:[%s1 + $0xb4] sm:$0xf]
  %v82 = vld [vmem:[%s1 + $0xb8] sm:$0xf]
  %v83 = vld [vmem:[%s1 + $0xbc] sm:$0xf]
  %v84 = vld [vmem:[%s1 + $0xc0] sm:$0xf]
  %v85 = vld [vmem:[%s1 + $0xc4] sm:$0xf]
  %v86 = vld [vmem:[%s1 + $0xc8] sm:$0xf]
  %v87 = vld [vmem:[%s1 + $0xcc] sm:$0xf]
  %v88 = vld [vmem:[%s1 + $0xd0] sm:$0xf]
  %v89 = vld [vmem:[%s1 + $0xd4] sm:$0xf]
  %v90 = vld [vmem:[%s1 + $0xd8] sm:$0xf]
  %v91 = vld [vmem:[%s1 + $0xdc] sm:$0xf]
  %v92 = vld [vmem:[%s1 + $0xe0] sm:$0xf]
  %v93 = vld [vmem:[%s1 + $0xe4] sm:$0xf]
  %v94 = vld [vmem:[%s1 + $0xe8] sm:$0xf]
  %v95 = vld [vmem:[%s1 + $0xec] sm:$0xf]
  %v96 = vld [vmem:[%s1 + $0xf0] sm:$0xf]
  %v97 = vld [vmem:[%s1 + $0xf4] sm:$0xf]
  %v98 = vld [vmem:[%s1 + $0xf8] sm:$0xf]
  %v99 = vld [vmem:[%s1 + $0xfc] sm:$0xf]
  %v104 = vunpack.c.l.b16 %v32
  %v105 = vunpack.c.h.b16 %v32
  %v106 = vunpack.c.l.b16 %v33
  %v107 = vunpack.c.h.b16 %v33
  %v108 = vunpack.c.l.b16 %v34
  %v109 = vunpack.c.h.b16 %v34
  %v110 = vunpack.c.l.b16 %v35
  %v111 = vunpack.c.h.b16 %v35
  %v112 = vpack.c.b16 %v108, %v104
  %v113 = vpack.c.b16 %v109, %v105
  %v114 = vpack.c.b16 %v110, %v106
  %v115 = vpack.c.b16 %v111, %v107
  %v184 = vunpack.c.l.b16 %v36
  %v185 = vunpack.c.l.b16 %v37
  %v186 = vunpack.c.l.b16 %v38
  %v187 = vunpack.c.l.b16 %v39
  %v188 = vunpack.c.l.b16 %v40
  %v189 = vunpack.c.l.b16 %v41
  %v190 = vunpack.c.l.b16 %v42
  %v191 = vunpack.c.l.b16 %v43
  %v192 = vunpack.c.l.b16 %v44
  %v193 = vunpack.c.l.b16 %v45
  %v194 = vunpack.c.l.b16 %v46
  %v195 = vunpack.c.l.b16 %v47
  %v196 = vunpack.c.l.b16 %v48
  %v197 = vunpack.c.l.b16 %v49
  %v198 = vunpack.c.l.b16 %v50
  %v199 = vunpack.c.l.b16 %v51
  %v200 = vunpack.c.l.b16 %v52
  %v201 = vunpack.c.l.b16 %v53
  %v202 = vunpack.c.l.b16 %v54
  %v203 = vunpack.c.l.b16 %v55
  %v204 = vunpack.c.l.b16 %v56
  %v205 = vunpack.c.l.b16 %v57
  %v206 = vunpack.c.l.b16 %v58
  %v207 = vunpack.c.l.b16 %v59
  %v208 = vunpack.c.l.b16 %v60
  %v209 = vunpack.c.l.b16 %v61
  %v210 = vunpack.c.l.b16 %v62
  %v211 = vunpack.c.l.b16 %v63
  %v212 = vunpack.c.l.b16 %v64
  %v213 = vunpack.c.l.b16 %v65
  %v214 = vunpack.c.l.b16 %v66
  %v215 = vunpack.c.l.b16 %v67
  %v216 = vunpack.c.l.b16 %v68
  %v217 = vunpack.c.l.b16 %v69
  %v218 = vunpack.c.l.b16 %v70
  %v219 = vunpack.c.l.b16 %v71
  %v220 = vunpack.c.l.b16 %v72
  %v221 = vunpack.c.l.b16 %v73
  %v222 = vunpack.c.l.b16 %v74
  %v223 = vunpack.c.l.b16 %v75
  %v224 = vunpack.c.l.b16 %v76
  %v225 = vunpack.c.l.b16 %v77
  %v226 = vunpack.c.l.b16 %v78
  %v227 = vunpack.c.l.b16 %v79
  %v228 = vunpack.c.l.b16 %v80
  %v229 = vunpack.c.l.b16 %v81
  %v230 = vunpack.c.l.b16 %v82
  %v231 = vunpack.c.l.b16 %v83
  %v232 = vunpack.c.l.b16 %v84
  %v233 = vunpack.c.l.b16 %v85
  %v234 = vunpack.c.l.b16 %v86
  %v235 = vunpack.c.l.b16 %v87
  %v236 = vunpack.c.l.b16 %v88
  %v237 = vunpack.c.l.b16 %v89
  %v238 = vunpack.c.l.b16 %v90
  %v239 = vunpack.c.l.b16 %v91
  %v240 = vunpack.c.l.b16 %v92
  %v241 = vunpack.c.l.b16 %v93
  %v242 = vunpack.c.l.b16 %v94
  %v243 = vunpack.c.l.b16 %v95
  %v244 = vunpack.c.l.b16 %v96
  %v245 = vunpack.c.l.b16 %v97
  %v246 = vunpack.c.l.b16 %v98
  %v247 = vunpack.c.l.b16 %v99
  %v248 = vpack.c.b16 %v185, %v184
  %v249 = vpack.c.b16 %v187, %v186
  %v250 = vpack.c.b16 %v189, %v188
  %v251 = vpack.c.b16 %v191, %v190
  %v252 = vpack.c.b16 %v193, %v192
  %v253 = vpack.c.b16 %v195, %v194
  %v254 = vpack.c.b16 %v197, %v196
  %v255 = vpack.c.b16 %v199, %v198
  %v256 = vpack.c.b16 %v201, %v200
  %v257 = vpack.c.b16 %v203, %v202
  %v258 = vpack.c.b16 %v205, %v204
  %v259 = vpack.c.b16 %v207, %v206
  %v260 = vpack.c.b16 %v209, %v208
  %v261 = vpack.c.b16 %v211, %v210
  %v262 = vpack.c.b16 %v213, %v212
  %v263 = vpack.c.b16 %v215, %v214
  %v264 = vpack.c.b16 %v217, %v216
  %v265 = vpack.c.b16 %v219, %v218
  %v266 = vpack.c.b16 %v221, %v220
  %v267 = vpack.c.b16 %v223, %v222
  %v268 = vpack.c.b16 %v225, %v224
  %v269 = vpack.c.b16 %v227, %v226
  %v270 = vpack.c.b16 %v229, %v228
  %v271 = vpack.c.b16 %v231, %v230
  %v272 = vpack.c.b16 %v233, %v232
  %v273 = vpack.c.b16 %v235, %v234
  %v274 = vpack.c.b16 %v237, %v236
  %v275 = vpack.c.b16 %v239, %v238
  %v276 = vpack.c.b16 %v241, %v240
  %v277 = vpack.c.b16 %v243, %v242
  %v278 = vpack.c.b16 %v245, %v244
  %v279 = vpack.c.b16 %v247, %v246
  %312 = vmatprep.subr.bf16.mxu0 0
  %313 = vmatpush1.bf16.msra.mxu0 %v248
  %314 = vmatprep.subr.bf16.mxu0 0
  %315 = vmatpush1.bf16.msra.mxu0 %v249
  %316 = vmatprep.subr.bf16.mxu0 0
  %317 = vmatpush1.bf16.msra.mxu0 %v250
  %318 = vmatprep.subr.bf16.mxu0 0
  %319 = vmatpush1.bf16.msra.mxu0 %v251
  %320 = vmatprep.subr.bf16.mxu0 0
  %321 = vmatpush1.bf16.msra.mxu0 %v252
  %322 = vmatprep.subr.bf16.mxu0 0
  %323 = vmatpush1.bf16.msra.mxu0 %v253
  %324 = vmatprep.subr.bf16.mxu0 0
  %325 = vmatpush1.bf16.msra.mxu0 %v254
  %326 = vmatprep.subr.bf16.mxu0 0
  %327 = vmatpush1.bf16.msra.mxu0 %v255
  %328 = vmatprep.subr.bf16.mxu0 0
  %329 = vmatpush1.bf16.msra.mxu0 %v256
  %330 = vmatprep.subr.bf16.mxu0 0
  %331 = vmatpush1.bf16.msra.mxu0 %v257
  %332 = vmatprep.subr.bf16.mxu0 0
  %333 = vmatpush1.bf16.msra.mxu0 %v258
  %334 = vmatprep.subr.bf16.mxu0 0
  %335 = vmatpush1.bf16.msra.mxu0 %v259
  %336 = vmatprep.subr.bf16.mxu0 0
  %337 = vmatpush1.bf16.msra.mxu0 %v260
  %338 = vmatprep.subr.bf16.mxu0 0
  %339 = vmatpush1.bf16.msra.mxu0 %v261
  %340 = vmatprep.subr.bf16.mxu0 0
  %341 = vmatpush1.bf16.msra.mxu0 %v262
  %342 = vmatprep.subr.bf16.mxu0 0
  %343 = vmatpush1.bf16.msra.mxu0 %v263
  %344 = vmatprep.mubr.bf16.mxu0 %v113
  %345 = vmatmul.mubr.bf16.gmra.mrb[0].mxu0 %v112
  %v346 = vpop.f32.mrb[0].mxu0
  %v347 = vadd.f32 0.0, %v346
  %v348 = vpop.f32.mrb[0].mxu0
  %v349 = vpop.f32.mrb[0].mxu0
  %v350 = vadd.f32 0.0, %v349
  %v351 = vpop.f32.mrb[0].mxu0
  %352 = vdwg.mxu0
  %353 = vmatprep.subr.bf16.mxu0 0
  %354 = vmatpush1.bf16.msra.mxu0 %v264
  %355 = vmatprep.subr.bf16.mxu0 0
  %356 = vmatpush1.bf16.msra.mxu0 %v265
  %357 = vmatprep.subr.bf16.mxu0 0
  %358 = vmatpush1.bf16.msra.mxu0 %v266
  %359 = vmatprep.subr.bf16.mxu0 0
  %360 = vmatpush1.bf16.msra.mxu0 %v267
  %361 = vmatprep.subr.bf16.mxu0 0
  %362 = vmatpush1.bf16.msra.mxu0 %v268
  %363 = vmatprep.subr.bf16.mxu0 0
  %364 = vmatpush1.bf16.msra.mxu0 %v269
  %365 = vmatprep.subr.bf16.mxu0 0
  %366 = vmatpush1.bf16.msra.mxu0 %v270
  %367 = vmatprep.subr.bf16.mxu0 0
  %368 = vmatpush1.bf16.msra.mxu0 %v271
  %369 = vmatprep.subr.bf16.mxu0 0
  %370 = vmatpush1.bf16.msra.mxu0 %v272
  %371 = vmatprep.subr.bf16.mxu0 0
  %372 = vmatpush1.bf16.msra.mxu0 %v273
  %373 = vmatprep.subr.bf16.mxu0 0
  %374 = vmatpush1.bf16.msra.mxu0 %v274
  %375 = vmatprep.subr.bf16.mxu0 0
  %376 = vmatpush1.bf16.msra.mxu0 %v275
  %377 = vmatprep.subr.bf16.mxu0 0
  %378 = vmatpush1.bf16.msra.mxu0 %v276
  %379 = vmatprep.subr.bf16.mxu0 0
  %380 = vmatpush1.bf16.msra.mxu0 %v277
  %381 = vmatprep.subr.bf16.mxu0 0
  %382 = vmatpush1.bf16.msra.mxu0 %v278
  %383 = vmatprep.subr.bf16.mxu0 0
  %384 = vmatpush1.bf16.msra.mxu0 %v279
  %385 = vmatprep.mubr.bf16.mxu0 %v115
  %386 = vmatmul.mubr.bf16.gmra.mrb[0].mxu0 %v114
  %v387 = vpop.f32.mrb[0].mxu0
  %v388 = vadd.f32 %v347, %v387
  %v389 = vpop.f32.mrb[0].mxu0
  %v390 = vpop.f32.mrb[0].mxu0
  %v391 = vadd.f32 %v350, %v390
  %v392 = vpop.f32.mrb[0].mxu0
  %393 = vdwg.mxu0
  %v394 = vadd.f32 %v30, %v388
  %v395 = vadd.f32 %v31, %v391
  %396 = vst [vmem:[#allocation2] sm:$0xff] %v394
  %397 = vst [vmem:[#allocation2 + $0x8] sm:$0xff] %v395
  // Predicated region
  $region30: #{kb_wic_forward.16} parent=0 // pred_check
    %p398 = pneg %p24
  $region31: #{kb_wic_forward.16} parent=0 // pred_check_branch
    %400 = sbr.rel (%p398) target = $region33
  $region32: #{kb_wic_forward.16} parent=0 // pred_region
    %v401 = vld [vmem:[#allocation2] sm:$0xff]
    %v402 = vld [vmem:[#allocation2 + $0x8] sm:$0xff]
    %v403 = vld [vmem:[%s2] sm:$0x1]
    %v405 = vlaneseq
    %v406 = vshrl.u32 %v405, 7
    %v407 = vsub.s32 0, %v406
    %v408 = vrot.slane %v403, %v407
    %v410 = vadd.f32 %v401, %v408
    %v411 = vadd.f32 %v402, %v408
    %v412 = vld [vmem:[%s3] sm:$0xf]
    %v413 = vld [vmem:[%s3 + $0x4] sm:$0xf]
    %v414 = vunpack.c.l.bf16 %v412
    %v415 = vunpack.c.l.bf16 %v413
    %v416 = vadd.f32 %v410, %v414
    %v417 = vadd.f32 %v411, %v415
    %418 = vadd.xlane.f32.xlu0 %v416
    %v419 = vpop.xlane.xlu0 %418
    %420 = vadd.xlane.f32.xlu0 %v417
    %v421 = vpop.xlane.xlu0 %420
    %v422 = vrcp.pop 128.0
    %v423 = vmul.f32 %v419, %v422
    %v424 = vmul.f32 %v421, %v422
    %v425 = vsub.f32 %v416, %v423
    %v426 = vsub.f32 %v417, %v424
    %v427 = vmul.f32 %v425, %v425
    %v428 = vmul.f32 %v426, %v426
    %429 = vadd.xlane.f32.xlu0 %v427
    %v430 = vpop.xlane.xlu0 %429
    %431 = vadd.xlane.f32.xlu0 %v428
    %v432 = vpop.xlane.xlu0 %431
    %v433 = vmul.f32 %v430, %v422
    %v434 = vmul.f32 %v432, %v422
    %v435 = vadd.f32 %v433, 1e-12
    %v436 = vadd.f32 %v434, 1e-12
    %v437 = vrsqrt.pop %v435
    %v438 = vrsqrt.pop %v436
    %v439 = vmul.f32 %v425, %v437
    %v440 = vmul.f32 %v426, %v438
    %v441 = vld [vmem:[%s4] sm:$0x1]
    %v443 = vlaneseq
    %v444 = vshrl.u32 %v443, 7
    %v445 = vsub.s32 0, %v444
    %v446 = vrot.slane %v441, %v445
    %v448 = vmul.f32 %v439, %v446
    %v449 = vmul.f32 %v440, %v446
    %v450 = vld [vmem:[%s5] sm:$0x1]
    %v452 = vlaneseq
    %v453 = vshrl.u32 %v452, 7
    %v454 = vsub.s32 0, %v453
    %v455 = vrot.slane %v450, %v454
    %v457 = vadd.f32 %v448, %v455
    %v458 = vadd.f32 %v449, %v455
    %v459 = vpack.c.bf16 %v458, %v457
    %v461 = vunpack.c.l.b16 %v459
    %v462 = vunpack.c.h.b16 %v459
    %v463 = vpack.c.b16 %v461, %v461
    %v464 = vpack.c.b16 %v462, %v462
    %467 = vst [vmem:[%s6] sm:$0xf] %v463
    %468 = vst [vmem:[%s6 + $0x4] sm:$0xf] %v464
  $region33: #{kb_wic_forward.16} parent=0 // pred_fallthru
    _
  // Predicated region
  $region34: #{kb_wic_forward.16} parent=0 // pred_check
    _
  $region35: #{kb_wic_forward.16} parent=0 // pred_check_branch
    %470 = sbr.rel (0) target = $region37
  $region36: #{kb_wic_forward.16} parent=0 // pred_region
    _
  $region37: #{kb_wic_forward.16} parent=0 // pred_fallthru
    _
  // Predicated region
  $region38: #{kb_wic_forward.16} parent=0 // pred_check
    _
  $region39: #{kb_wic_forward.16} parent=0 // pred_check_branch
    %472 = sbr.rel (0) target = $region41
  $region40: #{kb_wic_forward.16} parent=0 // pred_region
    _
  $region41: #{kb_wic_forward.16} parent=0 // pred_fallthru
    _

</llo_original>
